<compile_context>
chip_gen: v6e
topology: v6e:2x2x1
jax: 0.10.0
libtpu: 0.0.40
codegen_flags: <defaults>
</compile_context>

<pallas_src>
import jax
import jax.numpy as jnp
from jax.experimental import pallas as pl
from jax.experimental.pallas import tpu as pltpu


H1_DIM = 512
H2_DIM = 256


def _round_up(x, m):
    return ((x + m - 1) // m) * m


def _choose_tk(d_in):
    """Pick the layer-1 K tile (lane-aligned, v7x VMEM-safe, >=2 steps when possible)."""
    if d_in >= 4096:
        # (2048, 512) bf16 = 2 MiB per buffer; x2 double-buffering = 4 MiB.
        return 2048
    tk = max(256, (_round_up(d_in, 256) // 2 // 256) * 256)
    return tk


def _leaky_relu(x, slope=0.2):
    return jnp.where(x > 0, x, slope * x)


def discriminator_kernel(x_ref, w1_ref, b1_ref, w2_ref, b2_ref, w3_ref, b3_ref,
                         o_ref, h1_acc_ref):
    # x_ref:  (B_pad, tk)  bf16      w1_ref: (tk, 512)  bf16
    # b1_ref: (1, 512) f32           w2_ref: (512, 256) bf16
    # b2_ref: (1, 256) f32           w3_ref: (1, 256)   f32 (row for VPU reduce)
    # b3_ref: (1, 1)   f32           o_ref:  (B_pad, 128) f32
    # h1_acc_ref: (B_pad, 512) f32 scratch accumulator, resident across K steps.
    k = pl.program_id(0)

    @pl.when(k == 0)
    def _init():
        h1_acc_ref[...] = jnp.zeros_like(h1_acc_ref)

    # Layer 1: streamed over the flattened-image (K) axis; bf16 MXU, f32 accum.
    h1_acc_ref[...] += jnp.dot(x_ref[...], w1_ref[...],
                               preferred_element_type=jnp.float32)

    @pl.when(k == pl.num_programs(0) - 1)
    def _finalize():
        h1 = _leaky_relu(h1_acc_ref[...] + b1_ref[...])
        # Layer 2: bf16 inputs into the MXU, f32 accumulation.
        h2 = jnp.dot(h1.astype(jnp.bfloat16), w2_ref[...],
                     preferred_element_type=jnp.float32) + b2_ref[...]
        h2 = _leaky_relu(h2)
        # Layer 3 (256 -> 1): VPU multiply + lane reduction instead of an N=1
        # MXU matmul (which would use 1/256 of the MXU columns).
        logit = jnp.sum(h2 * w3_ref[...], axis=-1, keepdims=True) + b3_ref[...]
        # Broadcast the per-row logit across all 128 lanes so the store is a
        # full, unmasked vreg write; the wrapper reads column 0.
        o_ref[...] = jnp.broadcast_to(logit, o_ref.shape).astype(o_ref.dtype)


def init_params_raw(key, img_channels, img_size):
    """PyTorch-layout params: W (out, in), b (out,), U(-1/sqrt(fan_in), 1/sqrt(fan_in))."""
    d_in = img_channels * img_size * img_size
    dims = [(d_in, H1_DIM), (H1_DIM, H2_DIM), (H2_DIM, 1)]
    params = []
    for fan_in, fan_out in dims:
        key, kw, kb = jax.random.split(key, 3)
        bound = 1.0 / float(fan_in) ** 0.5
        w = jax.random.uniform(kw, (fan_out, fan_in), jnp.float32, -bound, bound)
        b = jax.random.uniform(kb, (fan_out,), jnp.float32, -bound, bound)
        params.append((w, b))
    return params


def prepare_params(raw_params, d_in):
    """One-time conversion to the kernel layout: transposed, bf16, K-padded."""
    (w1, b1), (w2, b2), (w3, b3) = raw_params
    tk = _choose_tk(d_in)
    d_in_pad = _round_up(d_in, tk)
    w1p = jnp.zeros((d_in_pad, H1_DIM), jnp.bfloat16)
    w1p = w1p.at[:d_in, :].set(w1.T.astype(jnp.bfloat16))
    return {
        "d_in": d_in,
        "d_in_pad": d_in_pad,
        "tk": tk,
        "w1": w1p,                                            # (d_in_pad, 512) bf16
        "b1": b1.reshape(1, H1_DIM).astype(jnp.float32),      # (1, 512) f32
        "w2": w2.T.astype(jnp.bfloat16),                      # (512, 256) bf16
        "b2": b2.reshape(1, H2_DIM).astype(jnp.float32),      # (1, 256) f32
        "w3": w3.reshape(1, H2_DIM).astype(jnp.float32),      # (1, 256) f32 row
        "b3": b3.reshape(1, 1).astype(jnp.float32),           # (1, 1) f32
    }


def discriminator_forward(x, kp):
    """x: (B, C, H, W) f32 -> logits of shape (B,) (matches PyTorch out.squeeze())."""
    B = x.shape[0]
    d_in, d_in_pad, tk = kp["d_in"], kp["d_in_pad"], kp["tk"]
    B_pad = _round_up(B, 8)

    x_flat = x.reshape(B, -1).astype(jnp.bfloat16)
    x_p = jnp.zeros((B_pad, d_in_pad), jnp.bfloat16).at[:B, :d_in].set(x_flat)

    n_k = d_in_pad // tk
    flops = 2 * B_pad * (d_in_pad * H1_DIM + H1_DIM * H2_DIM + H2_DIM)
    bytes_accessed = (
        x_p.size * 2                      # bf16 activations
        + kp["w1"].size * 2 + kp["w2"].size * 2   # bf16 weights
        + (H1_DIM + H2_DIM + H2_DIM + 1) * 4      # f32 biases + w3 row
        + B_pad * 128 * 4                         # output tile
    )

    out = pl.pallas_call(
        discriminator_kernel,
        out_shape=jax.ShapeDtypeStruct((B_pad, 128), jnp.float32),
        grid_spec=pltpu.PrefetchScalarGridSpec(
            num_scalar_prefetch=0,
            grid=(n_k,),
            in_specs=[
                pl.BlockSpec((B_pad, tk), lambda k: (0, k)),     # x: stream K
                pl.BlockSpec((tk, H1_DIM), lambda k: (k, 0)),    # W1: stream K
                pl.BlockSpec((1, H1_DIM), lambda k: (0, 0)),     # b1 (resident)
                pl.BlockSpec((H1_DIM, H2_DIM), lambda k: (0, 0)),  # W2 (resident)
                pl.BlockSpec((1, H2_DIM), lambda k: (0, 0)),     # b2 (resident)
                pl.BlockSpec((1, H2_DIM), lambda k: (0, 0)),     # w3 row (resident)
                pl.BlockSpec((1, 1), lambda k: (0, 0)),          # b3 (resident)
            ],
            out_specs=pl.BlockSpec((B_pad, 128), lambda k: (0, 0)),
            scratch_shapes=[pltpu.VMEM((B_pad, H1_DIM), jnp.float32)],
        ),
        compiler_params=pltpu.CompilerParams(
            dimension_semantics=("arbitrary",),   # K is a reduction axis
        ),
        cost_estimate=pl.CostEstimate(
            flops=flops, transcendentals=0, bytes_accessed=bytes_accessed
        ),
    )(x_p, kp["w1"], kp["b1"], kp["w2"], kp["b2"], kp["w3"], kp["b3"])

    # Lane-dense output tile: logits live broadcast across lanes; take column 0,
    # drop batch padding, and apply PyTorch-style .squeeze().
    return jnp.squeeze(out[:B, 0])


def reference_forward(x, raw_params):
    """Plain-JAX reference with matching numerics (bf16 MXU inputs, f32 accum)."""
    (w1, b1), (w2, b2), (w3, b3) = raw_params
    h = x.reshape(x.shape[0], -1)
    h = _leaky_relu(jnp.dot(h.astype(jnp.bfloat16), w1.T.astype(jnp.bfloat16),
                            preferred_element_type=jnp.float32) + b1)
    h = _leaky_relu(jnp.dot(h.astype(jnp.bfloat16), w2.T.astype(jnp.bfloat16),
                            preferred_element_type=jnp.float32) + b2)
    out = jnp.dot(h, w3.T) + b3      # final layer in f32, like the kernel
    return jnp.squeeze(out)


if __name__ == "__main__":
    B, C, H = 2, 4, 16  # img_channels=4, img_size=16 -> flattened dim 1024
    key = jax.random.PRNGKey(0)
    key, kx = jax.random.split(key)
    x = jax.random.normal(kx, (B, C, H, H), jnp.float32)

    raw_params = init_params_raw(key, C, H)
    kparams = prepare_params(raw_params, C * H * H)

    logits = discriminator_forward(x, kparams)
    logits = jax.block_until_ready(logits)

    ref = reference_forward(x, raw_params)
    assert logits.shape == (B,), f"unexpected output shape {logits.shape}"
    assert jnp.allclose(logits, ref, atol=2e-2, rtol=2e-2), (
        f"mismatch vs reference: {logits} vs {ref}"
    )

    print("KERNEL_OK")
</pallas_src>

<mosaic_0001>
module attributes {stable_mosaic.version = 11 : i64} {
  func.func @discriminator_kernel(%arg0: i32, %arg1: memref<8x512xbf16, #tpu.memory_space<vmem>>, %arg2: memref<512x512xbf16, #tpu.memory_space<vmem>>, %arg3: memref<1x512xf32, #tpu.memory_space<vmem>>, %arg4: memref<512x256xbf16, #tpu.memory_space<vmem>>, %arg5: memref<1x256xf32, #tpu.memory_space<vmem>>, %arg6: memref<1x256xf32, #tpu.memory_space<vmem>>, %arg7: memref<1x1xf32, #tpu.memory_space<vmem>>, %arg8: memref<8x128xf32, #tpu.memory_space<vmem>>, %arg9: memref<8x512xf32, #tpu.memory_space<vmem>>) attributes {dimension_semantics = [#tpu.dimension_semantics<arbitrary>], iteration_bounds = array<i64: 2>, scalar_prefetch = 0 : i64, scratch_operands = 1 : i64, tpu.core_type = #tpu.core_type<tc>, window_params = [{transform_indices = @transform_0, window_bounds = array<i64: 8, 512>}, {transform_indices = @transform_1, window_bounds = array<i64: 512, 512>}, {pipeline_mode = #tpu.pipeline_mode<synchronous>, transform_indices = @transform_2, window_bounds = array<i64: 1, 512>}, {pipeline_mode = #tpu.pipeline_mode<synchronous>, transform_indices = @transform_3, window_bounds = array<i64: 512, 256>}, {pipeline_mode = #tpu.pipeline_mode<synchronous>, transform_indices = @transform_4, window_bounds = array<i64: 1, 256>}, {pipeline_mode = #tpu.pipeline_mode<synchronous>, transform_indices = @transform_5, window_bounds = array<i64: 1, 256>}, {pipeline_mode = #tpu.pipeline_mode<synchronous>, transform_indices = @transform_6, window_bounds = array<i64: 1, 1>}, {pipeline_mode = #tpu.pipeline_mode<synchronous>, transform_indices = @transform_7, window_bounds = array<i64: 8, 128>}]} {
    %c0_i32 = arith.constant 0 : i32
    %0 = arith.cmpi eq, %arg0, %c0_i32 : i32
    %1 = arith.extui %0 : i1 to i32
    %c0_i32_0 = arith.constant 0 : i32
    %2 = arith.cmpi ne, %1, %c0_i32_0 : i32
    scf.if %2 {
      %cst_9 = arith.constant 0.000000e+00 : f32
      %12 = vector.broadcast %cst_9 : f32 to vector<8x512xf32>
      %c0_10 = arith.constant 0 : index
      %c0_11 = arith.constant 0 : index
      %13 = vector.load %arg9[%c0_10, %c0_11] : memref<8x512xf32, #tpu.memory_space<vmem>>, vector<8x512xf32>
      tpu.vector_store %arg9[%c0_10, %c0_11], %12 {strides = array<i32>} : memref<8x512xf32, #tpu.memory_space<vmem>>, vector<8x512xf32>,
    } else {
    }
    %c0 = arith.constant 0 : index
    %c0_1 = arith.constant 0 : index
    %3 = vector.load %arg9[%c0, %c0_1] : memref<8x512xf32, #tpu.memory_space<vmem>>, vector<8x512xf32>
    %c0_2 = arith.constant 0 : index
    %c0_3 = arith.constant 0 : index
    %4 = vector.load %arg1[%c0_2, %c0_3] : memref<8x512xbf16, #tpu.memory_space<vmem>>, vector<8x512xbf16>
    %c0_4 = arith.constant 0 : index
    %c0_5 = arith.constant 0 : index
    %5 = vector.load %arg2[%c0_4, %c0_5] : memref<512x512xbf16, #tpu.memory_space<vmem>>, vector<512x512xbf16>
    %cst = arith.constant dense<0.000000e+00> : vector<8x512xf32>
    %6 = tpu.matmul %4, %5, %cst {dimension_numbers = #tpu.dot_dimension_numbers<[1], [0], [0], [1], [0, 0, 1, 1], [], []>} : vector<8x512xbf16>, vector<512x512xbf16>, vector<8x512xf32> -> vector<8x512xf32>
    %7 = arith.addf %3, %6 : vector<8x512xf32>
    %c0_6 = arith.constant 0 : index
    %c0_7 = arith.constant 0 : index
    %8 = vector.load %arg9[%c0_6, %c0_7] : memref<8x512xf32, #tpu.memory_space<vmem>>, vector<8x512xf32>
    tpu.vector_store %arg9[%c0_6, %c0_7], %7 {strides = array<i32>} : memref<8x512xf32, #tpu.memory_space<vmem>>, vector<8x512xf32>,
    %c1_i32 = arith.constant 1 : i32
    %9 = arith.cmpi eq, %arg0, %c1_i32 : i32
    %10 = arith.extui %9 : i1 to i32
    %c0_i32_8 = arith.constant 0 : i32
    %11 = arith.cmpi ne, %10, %c0_i32_8 : i32
    scf.if %11 {
      %c0_9 = arith.constant 0 : index
      %c0_10 = arith.constant 0 : index
      %12 = vector.load %arg9[%c0_9, %c0_10] : memref<8x512xf32, #tpu.memory_space<vmem>>, vector<8x512xf32>
      %c0_11 = arith.constant 0 : index
      %c0_12 = arith.constant 0 : index
      %13 = vector.load %arg3[%c0_11, %c0_12] : memref<1x512xf32, #tpu.memory_space<vmem>>, vector<1x512xf32>
      %14 = vector.broadcast %13 : vector<1x512xf32> to vector<8x512xf32>
      %15 = arith.addf %12, %14 : vector<8x512xf32>
      %cst_13 = arith.constant 0.000000e+00 : f32
      %16 = vector.broadcast %cst_13 : f32 to vector<8x512xf32>
      %17 = arith.cmpf ogt, %15, %16 : vector<8x512xf32>
      %cst_14 = arith.constant 2.000000e-01 : f32
      %18 = vector.broadcast %cst_14 : f32 to vector<8x512xf32>
      %19 = arith.mulf %18, %15 : vector<8x512xf32>
      %20 = arith.select %17, %15, %19 : vector<8x512xi1>, vector<8x512xf32>
      %21 = arith.truncf %20 : vector<8x512xf32> to vector<8x512xbf16>
      %c0_15 = arith.constant 0 : index
      %c0_16 = arith.constant 0 : index
      %22 = vector.load %arg4[%c0_15, %c0_16] : memref<512x256xbf16, #tpu.memory_space<vmem>>, vector<512x256xbf16>
      %cst_17 = arith.constant dense<0.000000e+00> : vector<8x256xf32>
      %23 = tpu.matmul %21, %22, %cst_17 {dimension_numbers = #tpu.dot_dimension_numbers<[1], [0], [0], [1], [0, 0, 1, 1], [], []>} : vector<8x512xbf16>, vector<512x256xbf16>, vector<8x256xf32> -> vector<8x256xf32>
      %c0_18 = arith.constant 0 : index
      %c0_19 = arith.constant 0 : index
      %24 = vector.load %arg5[%c0_18, %c0_19] : memref<1x256xf32, #tpu.memory_space<vmem>>, vector<1x256xf32>
      %25 = vector.broadcast %24 : vector<1x256xf32> to vector<8x256xf32>
      %26 = arith.addf %23, %25 : vector<8x256xf32>
      %cst_20 = arith.constant 0.000000e+00 : f32
      %27 = vector.broadcast %cst_20 : f32 to vector<8x256xf32>
      %28 = arith.cmpf ogt, %26, %27 : vector<8x256xf32>
      %cst_21 = arith.constant 2.000000e-01 : f32
      %29 = vector.broadcast %cst_21 : f32 to vector<8x256xf32>
      %30 = arith.mulf %29, %26 : vector<8x256xf32>
      %31 = arith.select %28, %26, %30 : vector<8x256xi1>, vector<8x256xf32>
      %c0_22 = arith.constant 0 : index
      %c0_23 = arith.constant 0 : index
      %32 = vector.load %arg6[%c0_22, %c0_23] : memref<1x256xf32, #tpu.memory_space<vmem>>, vector<1x256xf32>
      %33 = vector.broadcast %32 : vector<1x256xf32> to vector<8x256xf32>
      %34 = arith.mulf %31, %33 : vector<8x256xf32>
      %cst_24 = arith.constant dense<0.000000e+00> : vector<8xf32>
      %35 = vector.multi_reduction <add>, %34, %cst_24 [1] : vector<8x256xf32> to vector<8xf32>
      %36 = vector.shape_cast %35 : vector<8xf32> to vector<8x1xf32>
      %c0_25 = arith.constant 0 : index
      %c0_26 = arith.constant 0 : index
      %37 = vector.load %arg7[%c0_25, %c0_26] : memref<1x1xf32, #tpu.memory_space<vmem>>, vector<1x1xf32>
      %38 = vector.broadcast %37 : vector<1x1xf32> to vector<8x1xf32>
      %39 = arith.addf %36, %38 : vector<8x1xf32>
      %40 = vector.shape_cast %39 : vector<8x1xf32> to vector<8x1xf32>
      %41 = vector.broadcast %40 : vector<8x1xf32> to vector<8x128xf32>
      %c0_27 = arith.constant 0 : index
      %c0_28 = arith.constant 0 : index
      %42 = vector.load %arg8[%c0_27, %c0_28] : memref<8x128xf32, #tpu.memory_space<vmem>>, vector<8x128xf32>
      tpu.vector_store %arg8[%c0_27, %c0_28], %41 {strides = array<i32>} : memref<8x128xf32, #tpu.memory_space<vmem>>, vector<8x128xf32>,
    } else {
    }
    return
  }
  func.func @transform_0(%arg0: i32) -> (i32, i32) {
    %c0_i32 = arith.constant 0 : i32
    %c0_i32_0 = arith.constant 0 : i32
    return %c0_i32, %arg0 : i32, i32
  }
  func.func @transform_1(%arg0: i32) -> (i32, i32) {
    %c0_i32 = arith.constant 0 : i32
    %c0_i32_0 = arith.constant 0 : i32
    return %arg0, %c0_i32 : i32, i32
  }
  func.func @transform_2(%arg0: i32) -> (i32, i32) {
    %c0_i32 = arith.constant 0 : i32
    %c0_i32_0 = arith.constant 0 : i32
    %c0_i32_1 = arith.constant 0 : i32
    return %c0_i32, %c0_i32_0 : i32, i32
  }
  func.func @transform_3(%arg0: i32) -> (i32, i32) {
    %c0_i32 = arith.constant 0 : i32
    %c0_i32_0 = arith.constant 0 : i32
    %c0_i32_1 = arith.constant 0 : i32
    return %c0_i32, %c0_i32_0 : i32, i32
  }
  func.func @transform_4(%arg0: i32) -> (i32, i32) {
    %c0_i32 = arith.constant 0 : i32
    %c0_i32_0 = arith.constant 0 : i32
    %c0_i32_1 = arith.constant 0 : i32
    return %c0_i32, %c0_i32_0 : i32, i32
  }
  func.func @transform_5(%arg0: i32) -> (i32, i32) {
    %c0_i32 = arith.constant 0 : i32
    %c0_i32_0 = arith.constant 0 : i32
    %c0_i32_1 = arith.constant 0 : i32
    return %c0_i32, %c0_i32_0 : i32, i32
  }
  func.func @transform_6(%arg0: i32) -> (i32, i32) {
    %c0_i32 = arith.constant 0 : i32
    %c0_i32_0 = arith.constant 0 : i32
    %c0_i32_1 = arith.constant 0 : i32
    return %c0_i32, %c0_i32_0 : i32, i32
  }
  func.func @transform_7(%arg0: i32) -> (i32, i32) {
    %c0_i32 = arith.constant 0 : i32
    %c0_i32_0 = arith.constant 0 : i32
    %c0_i32_1 = arith.constant 0 : i32
    return %c0_i32, %c0_i32_0 : i32, i32
  }
}

</mosaic_0001>

<llo_original>
// kernel: tpu_custom_call.1
$region0: #{tpu_custom_call.1}
  #allocation0 [shape = 'u32[]', space=smem, size = 0x4, offset = 0x4, fixed_abs, tag = 'smem constant byte address 0x4 - core index']
  #allocation1 [shape = 'u32[144,128]{1,0:T(1,128)}', space=vmem, size = 0x12000, scoped, tag = 'internal scratch']
  #allocation2 [shape = 'f32[8,512]{1,0:T(8,128)}', space=vmem, size = 0x4000, scoped, tag = 'scratch operand']
  #allocation3 [shape = 'f32[1,1]{1,0:T(1,128)S(1)}', space=vmem, size = 0x200, scoped, tag = 'scoped memory for tpu_custom_call.1']
  %s0 = inlined_call_operand.hbm [shape: bf16[8,1024], index: 0, kind: input, shape index: {}]
  %s1 = inlined_call_operand.hbm [shape: bf16[1024,512], index: 1, kind: input, shape index: {}]
  %s2 = inlined_call_operand.vmem [shape: f32[1,512], index: 2, kind: input, shape index: {}]
  %s3 = inlined_call_operand.hbm [shape: bf16[512,256], index: 3, kind: input, shape index: {}]
  %s4 = inlined_call_operand.vmem [shape: f32[1,256], index: 4, kind: input, shape index: {}]
  %s5 = inlined_call_operand.vmem [shape: f32[1,256], index: 5, kind: input, shape index: {}]
  %s6 = inlined_call_operand.<no memory space> [shape: f32[1,1], index: 6, kind: input, shape index: {}]
  %s7 = inlined_call_operand.hbm [shape: f32[8,128], index: 7, kind: output, shape index: {}]
  %s8 = sld [smem:[#allocation0]]
  $region81: #{tpu_custom_call.1} parent=0
    _
  %s10 = ssub.s32 1, %s8
  %s11 = scalar_select 0, %s10, %s8
  %v12 = vstv %s6
  %13 = vst [vmem:[#allocation3] sm:$0x1] %v12
  $region1: #{tpu_custom_call.1} parent=0
    #allocation4 [shape = 'u8[16384]{0}', space=vmem, size = 0x4000, scoped, tag = 'input window, operand 0']
    #allocation5 [shape = 's32[2]{0}', space=sflag, size = 0x8, scoped, tag = 'scoped memory for tpu_custom_call.1']
    #allocation6 [shape = 's32[2]{0}', space=sflag, size = 0x8, scoped, tag = 'scoped memory for tpu_custom_call.1']
    #allocation7 [shape = 'u8[1048576]{0}', space=vmem, size = 0x100000, scoped, tag = 'input window, operand 1']
    #allocation8 [shape = 's32[2]{0}', space=sflag, size = 0x8, scoped, tag = 'scoped memory for tpu_custom_call.1']
    #allocation9 [shape = 'u8[262144]{0}', space=vmem, size = 0x40000, scoped, tag = 'input window, operand 3, single buffered']
    #allocation10 [shape = 'u8[4096]{0}', space=vmem, size = 0x1000, scoped, tag = 'output window, operand 0, single buffered']
    %14 = vsyncpa [#allocation5], 0
    %s15 = scalar_lea.sflag [#allocation5], 1
    %16 = vsyncpa %s15, 0
    %17 = vsyncpa [#allocation8], 0
    %s18 = scalar_lea.sflag [#allocation8], 1
    %19 = vsyncpa %s18, 0
    %20 = vsyncpa [#allocation6], 0
    loop: start=0, step=1, limit=4
    $region2: #{tpu_custom_call.1} parent=1 // loop_pre_header
      _
    $region3: #{tpu_custom_call.1} parent=1 // loop_header
      %s22 = sphi 0, %s26
      %p23 = scmp.ge.s32.totalorder %s22, 4
      %s32 = sphi 0, %s34
      %s35 = sphi 0, %s32
      %s36 = sphi 0, %s35
      %s52 = sphi 0, %s36
      %s58 = sphi 0, %s60
      %s61 = sphi 0, %s58
      %s62 = sphi 0, %s61
      %s78 = sphi 0, %s62
      %s82 = sphi 0, %s82
      %s84 = sphi 0, %s82
      %s85 = sphi 0, %s84
      %s99 = sphi 0, %s85
      %s103 = sphi 0, %s103
      %s105 = sphi 0, %s103
      %s106 = sphi 0, %s105
      %s120 = sphi 0, %s106
      %s124 = sphi 0, %s124
      %s126 = sphi 0, %s124
      %s127 = sphi 0, %s126
      %s141 = sphi 0, %s127
      %s145 = sphi 0, %s145
      %s147 = sphi 0, %s145
      %s148 = sphi 0, %s147
      %s162 = sphi 0, %s148
      %s166 = sphi 0, %s166
      %s168 = sphi 0, %s166
      %s169 = sphi 0, %s168
      %s183 = sphi 0, %s169
      %s187 = sphi 0, %s187
      %s189 = sphi 0, %s187
      %s190 = sphi 0, %s189
      %s204 = sphi 0, %s190
    $region4: #{tpu_custom_call.1} parent=1 // loop_header_branch
      %25 = sbr.rel (%p23) target = $region8
    $region5: #{tpu_custom_call.1} parent=1 // loop_body
      %s27 = ssub.s32 %s22, 1
      %s28 = ssub.s32 %s22, 2
      %s29 = sadd.s32 %s22, 1
      %s30 = ssub.s32 %s22, %s29
      %p31 = scmp.eq.s32.totalorder %s30, 0
      %s33 = sadd.s32 %s32, 1
      %s34 = scalar_select %p31, %s32, %s33
      %p37 = pneg %p31
      %p38 = scmp.eq.s32.totalorder %s22, 1
      %p39 = por %p37, %p38
      %p40 = scmp.ne.s32.totalorder %s32, %s35
      %p41 = scmp.eq.s32.totalorder %s22, 0
      %p42 = por %p40, %p41
      %p43 = scmp.ne.s32.totalorder %s32, %s35
      %p44 = scmp.eq.s32.totalorder %s27, 1
      %p45 = por %p43, %p44
      %p46 = scmp.ne.s32.totalorder %s35, %s36
      %p47 = scmp.eq.s32.totalorder %s27, 0
      %p48 = por %p46, %p47
      %p49 = scmp.ne.s32.totalorder %s35, %s36
      %p50 = scmp.eq.s32.totalorder %s28, 1
      %p51 = por %p49, %p50
      %p53 = scmp.ne.s32.totalorder %s36, %s52
      %p54 = scmp.eq.s32.totalorder %s28, 0
      %p55 = por %p53, %p54
      %s56 = ssub.s32 %s22, %s29
      %p57 = scmp.eq.s32.totalorder %s56, 0
      %s59 = sadd.s32 %s58, 1
      %s60 = scalar_select %p57, %s58, %s59
      %p63 = pneg %p57
      %p64 = scmp.eq.s32.totalorder %s22, 1
      %p65 = por %p63, %p64
      %p66 = scmp.ne.s32.totalorder %s58, %s61
      %p67 = scmp.eq.s32.totalorder %s22, 0
      %p68 = por %p66, %p67
      %p69 = scmp.ne.s32.totalorder %s58, %s61
      %p70 = scmp.eq.s32.totalorder %s27, 1
      %p71 = por %p69, %p70
      %p72 = scmp.ne.s32.totalorder %s61, %s62
      %p73 = scmp.eq.s32.totalorder %s27, 0
      %p74 = por %p72, %p73
      %p75 = scmp.ne.s32.totalorder %s61, %s62
      %p76 = scmp.eq.s32.totalorder %s28, 1
      %p77 = por %p75, %p76
      %p79 = scmp.ne.s32.totalorder %s62, %s78
      %p80 = scmp.eq.s32.totalorder %s28, 0
      %p81 = por %p79, %p80
      %s83 = sadd.s32 %s82, 1
      %p86 = scmp.eq.s32.totalorder %s22, 1
      %p87 = scmp.ne.s32.totalorder %s82, %s84
      %p88 = scmp.eq.s32.totalorder %s22, 0
      %p89 = por %p87, %p88
      %p90 = scmp.ne.s32.totalorder %s82, %s84
      %p91 = scmp.eq.s32.totalorder %s27, 1
      %p92 = por %p90, %p91
      %p93 = scmp.ne.s32.totalorder %s84, %s85
      %p94 = scmp.eq.s32.totalorder %s27, 0
      %p95 = por %p93, %p94
      %p96 = scmp.ne.s32.totalorder %s84, %s85
      %p97 = scmp.eq.s32.totalorder %s28, 1
      %p98 = por %p96, %p97
      %p100 = scmp.ne.s32.totalorder %s85, %s99
      %p101 = scmp.eq.s32.totalorder %s28, 0
      %p102 = por %p100, %p101
      %s104 = sadd.s32 %s103, 1
      %p107 = scmp.eq.s32.totalorder %s22, 1
      %p108 = scmp.ne.s32.totalorder %s103, %s105
      %p109 = scmp.eq.s32.totalorder %s22, 0
      %p110 = por %p108, %p109
      %p111 = scmp.ne.s32.totalorder %s103, %s105
      %p112 = scmp.eq.s32.totalorder %s27, 1
      %p113 = por %p111, %p112
      %p114 = scmp.ne.s32.totalorder %s105, %s106
      %p115 = scmp.eq.s32.totalorder %s27, 0
      %p116 = por %p114, %p115
      %p117 = scmp.ne.s32.totalorder %s105, %s106
      %p118 = scmp.eq.s32.totalorder %s28, 1
      %p119 = por %p117, %p118
      %p121 = scmp.ne.s32.totalorder %s106, %s120
      %p122 = scmp.eq.s32.totalorder %s28, 0
      %p123 = por %p121, %p122
      %s125 = sadd.s32 %s124, 1
      %p128 = scmp.eq.s32.totalorder %s22, 1
      %p129 = scmp.ne.s32.totalorder %s124, %s126
      %p130 = scmp.eq.s32.totalorder %s22, 0
      %p131 = por %p129, %p130
      %p132 = scmp.ne.s32.totalorder %s124, %s126
      %p133 = scmp.eq.s32.totalorder %s27, 1
      %p134 = por %p132, %p133
      %p135 = scmp.ne.s32.totalorder %s126, %s127
      %p136 = scmp.eq.s32.totalorder %s27, 0
      %p137 = por %p135, %p136
      %p138 = scmp.ne.s32.totalorder %s126, %s127
      %p139 = scmp.eq.s32.totalorder %s28, 1
      %p140 = por %p138, %p139
      %p142 = scmp.ne.s32.totalorder %s127, %s141
      %p143 = scmp.eq.s32.totalorder %s28, 0
      %p144 = por %p142, %p143
      %s146 = sadd.s32 %s145, 1
      %p149 = scmp.eq.s32.totalorder %s22, 1
      %p150 = scmp.ne.s32.totalorder %s145, %s147
      %p151 = scmp.eq.s32.totalorder %s22, 0
      %p152 = por %p150, %p151
      %p153 = scmp.ne.s32.totalorder %s145, %s147
      %p154 = scmp.eq.s32.totalorder %s27, 1
      %p155 = por %p153, %p154
      %p156 = scmp.ne.s32.totalorder %s147, %s148
      %p157 = scmp.eq.s32.totalorder %s27, 0
      %p158 = por %p156, %p157
      %p159 = scmp.ne.s32.totalorder %s147, %s148
      %p160 = scmp.eq.s32.totalorder %s28, 1
      %p161 = por %p159, %p160
      %p163 = scmp.ne.s32.totalorder %s148, %s162
      %p164 = scmp.eq.s32.totalorder %s28, 0
      %p165 = por %p163, %p164
      %s167 = sadd.s32 %s166, 1
      %p170 = scmp.eq.s32.totalorder %s22, 1
      %p171 = scmp.ne.s32.totalorder %s166, %s168
      %p172 = scmp.eq.s32.totalorder %s22, 0
      %p173 = por %p171, %p172
      %p174 = scmp.ne.s32.totalorder %s166, %s168
      %p175 = scmp.eq.s32.totalorder %s27, 1
      %p176 = por %p174, %p175
      %p177 = scmp.ne.s32.totalorder %s168, %s169
      %p178 = scmp.eq.s32.totalorder %s27, 0
      %p179 = por %p177, %p178
      %p180 = scmp.ne.s32.totalorder %s168, %s169
      %p181 = scmp.eq.s32.totalorder %s28, 1
      %p182 = por %p180, %p181
      %p184 = scmp.ne.s32.totalorder %s169, %s183
      %p185 = scmp.eq.s32.totalorder %s28, 0
      %p186 = por %p184, %p185
      %s188 = sadd.s32 %s187, 1
      %p191 = scmp.eq.s32.totalorder %s22, 1
      %p192 = scmp.ne.s32.totalorder %s187, %s189
      %p193 = scmp.eq.s32.totalorder %s22, 0
      %p194 = por %p192, %p193
      %p195 = scmp.ne.s32.totalorder %s187, %s189
      %p196 = scmp.eq.s32.totalorder %s27, 1
      %p197 = por %p195, %p196
      %p198 = scmp.ne.s32.totalorder %s189, %s190
      %p199 = scmp.eq.s32.totalorder %s27, 0
      %p200 = por %p198, %p199
      %p201 = scmp.ne.s32.totalorder %s189, %s190
      %p202 = scmp.eq.s32.totalorder %s28, 1
      %p203 = por %p201, %p202
      %p205 = scmp.ne.s32.totalorder %s190, %s204
      %p206 = scmp.eq.s32.totalorder %s28, 0
      %p207 = por %p205, %p206
      %p208 = scmp.le.s32.totalorder 1, %s22
      %p209 = scmp.lt.s32.totalorder %s22, 3
      %p210 = pnand %p208, %p209
      %p211 = pneg %p210
      // Predicated region
      $region9: #{tpu_custom_call.1} parent=5 // pred_check
        _
      $region10: #{tpu_custom_call.1} parent=5 // pred_check_branch
        %213 = sbr.rel (%p210) target = $region12
      $region11: #{tpu_custom_call.1} parent=5 // pred_region
        %s214 = ssub.s32 %s22, 1
        // Predicated region
        $region13: #{tpu_custom_call.1} parent=11 // pred_check
          %p215 = pneg %p95
        $region14: #{tpu_custom_call.1} parent=11 // pred_check_branch
          %217 = sbr.rel (%p215) target = $region16
        $region15: #{tpu_custom_call.1} parent=11 // pred_region
          _
        $region16: #{tpu_custom_call.1} parent=11 // pred_fallthru
          _
        // Predicated region
        $region17: #{tpu_custom_call.1} parent=11 // pred_check
          %p218 = pneg %p116
        $region18: #{tpu_custom_call.1} parent=11 // pred_check_branch
          %220 = sbr.rel (%p218) target = $region20
        $region19: #{tpu_custom_call.1} parent=11 // pred_region
          %s222 = ssub.s32 8192, 8192
          %223 = vsyncadd [#allocation8], %s222
          %s224 = sshll.u32 [#allocation9], 4
          %s225 = int_to_ptr.vmem [resolvable:$true] %s224
          %230 = dma.hbm_to_vmem [thread:$0]  %s3, 8192, %s225, [#allocation8], 128, 128, 8
        $region20: #{tpu_custom_call.1} parent=11 // pred_fallthru
          _
        // Predicated region
        $region21: #{tpu_custom_call.1} parent=11 // pred_check
          %p231 = pneg %p137
        $region22: #{tpu_custom_call.1} parent=11 // pred_check_branch
          %233 = sbr.rel (%p231) target = $region24
        $region23: #{tpu_custom_call.1} parent=11 // pred_region
          _
        $region24: #{tpu_custom_call.1} parent=11 // pred_fallthru
          _
        // Predicated region
        $region25: #{tpu_custom_call.1} parent=11 // pred_check
          %p234 = pneg %p158
        $region26: #{tpu_custom_call.1} parent=11 // pred_check_branch
          %236 = sbr.rel (%p234) target = $region28
        $region27: #{tpu_custom_call.1} parent=11 // pred_region
          _
        $region28: #{tpu_custom_call.1} parent=11 // pred_fallthru
          _
        // Predicated region
        $region29: #{tpu_custom_call.1} parent=11 // pred_check
          %p237 = pneg %p179
        $region30: #{tpu_custom_call.1} parent=11 // pred_check_branch
          %239 = sbr.rel (%p237) target = $region32
        $region31: #{tpu_custom_call.1} parent=11 // pred_region
          _
        $region32: #{tpu_custom_call.1} parent=11 // pred_fallthru
          _
      $region12: #{tpu_custom_call.1} parent=5 // pred_fallthru
        _
      %p240 = scmp.lt.s32.totalorder %s22, 2
      // Predicated region
      $region33: #{tpu_custom_call.1} parent=5 // pred_check
        %p241 = pneg %p240
      $region34: #{tpu_custom_call.1} parent=5 // pred_check_branch
        %243 = sbr.rel (%p241) target = $region36
      $region35: #{tpu_custom_call.1} parent=5 // pred_region
        // Predicated region
        $region37: #{tpu_custom_call.1} parent=35 // pred_check
          %p244 = pneg %p42
        $region38: #{tpu_custom_call.1} parent=35 // pred_check_branch
          %246 = sbr.rel (%p244) target = $region40
        $region39: #{tpu_custom_call.1} parent=35 // pred_region
          %s247 = sand.u32 %s32, 1
          %s248 = scalar_lea.sflag [#allocation5], %s247
          %s249 = sand.u32 %s32, 1
          %s250 = smul.addr %s249, 16
          %s251 = scalar_lea.vmem [#allocation4], %s250
          %s252 = smul.u32 4, %s22
          %s254 = ssub.s32 256, 256
          %255 = vsyncadd %s248, %s254
          %s256 = smul.addr %s252, 64
          %s257 = scalar_lea.hbm %s0, %s256
          %s259 = sshll.u32 %s251, 4
          %s260 = int_to_ptr.vmem [resolvable:$true] %s259
          %262 = dma.hbm_to_vmem [thread:$0]  %s257, 256, %s260, %s248
        $region40: #{tpu_custom_call.1} parent=35 // pred_fallthru
          _
        // Predicated region
        $region41: #{tpu_custom_call.1} parent=35 // pred_check
          %p263 = pneg %p68
        $region42: #{tpu_custom_call.1} parent=35 // pred_check_branch
          %265 = sbr.rel (%p263) target = $region44
        $region43: #{tpu_custom_call.1} parent=35 // pred_region
          %s266 = sand.u32 %s22, 1
          %s267 = scalar_lea.sflag [#allocation8], %s266
          %s268 = sand.u32 %s58, 1
          %s269 = smul.addr %s268, 1024
          %s270 = scalar_lea.vmem [#allocation7], %s269
          %s271 = smul.u32 64, %s22
          %s273 = ssub.s32 16384, 16384
          %274 = vsyncadd %s267, %s273
          %s275 = smul.addr %s271, 4
          %s276 = smul.addr %s275, 64
          %s277 = scalar_lea.hbm %s1, %s276
          %s278 = sshll.u32 %s270, 4
          %s279 = int_to_ptr.vmem [resolvable:$true] %s278
          %284 = dma.hbm_to_vmem [thread:$0]  %s277, 16384, %s279, %s267, 256, 256, 16
        $region44: #{tpu_custom_call.1} parent=35 // pred_fallthru
          _
      $region36: #{tpu_custom_call.1} parent=5 // pred_fallthru
        _
      %p285 = scmp.le.s32.totalorder 1, %s22
      %p286 = scmp.lt.s32.totalorder %s22, 3
      %p287 = pnand %p285, %p286
      %p288 = pneg %p287
      // Predicated region
      $region45: #{tpu_custom_call.1} parent=5 // pred_check
        _
      $region46: #{tpu_custom_call.1} parent=5 // pred_check_branch
        %290 = sbr.rel (%p287) target = $region48
      $region47: #{tpu_custom_call.1} parent=5 // pred_region
        %s291 = ssub.s32 %s22, 1
        %s292 = sand.u32 %s35, 1
        %s293 = scalar_lea.sflag [#allocation5], %s292
        %s294 = sand.u32 %s35, 1
        %s295 = smul.addr %s294, 16
        %s296 = scalar_lea.vmem [#allocation4], %s295
        // Predicated region
        $region49: #{tpu_custom_call.1} parent=47 // pred_check
          %p297 = pneg %p48
        $region50: #{tpu_custom_call.1} parent=47 // pred_check_branch
          %299 = sbr.rel (%p297) target = $region52
        $region51: #{tpu_custom_call.1} parent=47 // pred_region
          %300 = dma.done %s293, 256
        $region52: #{tpu_custom_call.1} parent=47 // pred_fallthru
          _
        %s301 = sand.u32 %s27, 1
        %s302 = scalar_lea.sflag [#allocation8], %s301
        %s303 = sand.u32 %s61, 1
        %s304 = smul.addr %s303, 1024
        %s305 = scalar_lea.vmem [#allocation7], %s304
        // Predicated region
        $region53: #{tpu_custom_call.1} parent=47 // pred_check
          %p306 = pneg %p74
        $region54: #{tpu_custom_call.1} parent=47 // pred_check_branch
          %308 = sbr.rel (%p306) target = $region56
        $region55: #{tpu_custom_call.1} parent=47 // pred_region
          %309 = dma.done %s302, 16384
        $region56: #{tpu_custom_call.1} parent=47 // pred_fallthru
          _
        // Predicated region
        $region57: #{tpu_custom_call.1} parent=47 // pred_check
          %p310 = pneg %p116
        $region58: #{tpu_custom_call.1} parent=47 // pred_check_branch
          %312 = sbr.rel (%p310) target = $region60
        $region59: #{tpu_custom_call.1} parent=47 // pred_region
          %313 = dma.done [#allocation8], 8192
        $region60: #{tpu_custom_call.1} parent=47 // pred_fallthru
          _
        %s314 = sand.u32 %s35, 1
        %s315 = scalar_lea.sflag [#allocation5], %s314
        %s316 = sand.u32 %s35, 1
        %s317 = smul.addr %s316, 16
        %s318 = scalar_lea.vmem [#allocation4], %s317
        %p319 = pneg %p48
        %p320 = pneg %p45
        %s321 = sand.u32 %s27, 1
        %s322 = scalar_lea.sflag [#allocation8], %s321
        %s323 = sand.u32 %s61, 1
        %s324 = smul.addr %s323, 1024
        %s325 = scalar_lea.vmem [#allocation7], %s324
        %p326 = pneg %p74
        %p327 = pneg %p71
        %p328 = pneg %p95
        %p329 = pneg %p92
        %p330 = pneg %p116
        %p331 = pneg %p113
        %p332 = pneg %p137
        %p333 = pneg %p134
        %p334 = pneg %p158
        %p335 = pneg %p155
        %p336 = pneg %p179
        %p337 = pneg %p176
        %p338 = pneg %p200
        %p339 = pneg %p197
        %s340 = smul.u32 4, %s27
        %s341 = smul.u32 64, %s27
        %p342 = scmp.eq.s32.totalorder %s27, 0
        // Predicated region
        $region61: #{tpu_custom_call.1} parent=47 // pred_check
          %p343 = pneg %p342
        $region62: #{tpu_custom_call.1} parent=47 // pred_check_branch
          %345 = sbr.rel (%p343) target = $region64
        $region63: #{tpu_custom_call.1} parent=47 // pred_region
          %346 = vst [vmem:[#allocation2] sm:$0xff] 0.0
          %347 = vst [vmem:[#allocation2 + $0x8] sm:$0xff] 0.0
          %348 = vst [vmem:[#allocation2 + $0x10] sm:$0xff] 0.0
          %349 = vst [vmem:[#allocation2 + $0x18] sm:$0xff] 0.0
        $region64: #{tpu_custom_call.1} parent=47 // pred_fallthru
          _
        %v350 = vld [vmem:[#allocation2] sm:$0xff]
        %v351 = vld [vmem:[#allocation2 + $0x8] sm:$0xff]
        %v352 = vld [vmem:[#allocation2 + $0x10] sm:$0xff]
        %v353 = vld [vmem:[#allocation2 + $0x18] sm:$0xff]
        %v354 = vld [vmem:[%s296] sm:$0xff]
        %v355 = vld [vmem:[%s296 + $0x8] sm:$0xff]
        %v356 = vld [vmem:[%s305] sm:$0xff]
        %v357 = vld [vmem:[%s305 + $0x8] sm:$0xff]
        %v358 = vld [vmem:[%s305 + $0x10] sm:$0xff]
        %v359 = vld [vmem:[%s305 + $0x18] sm:$0xff]
        %v360 = vld [vmem:[%s305 + $0x20] sm:$0xff]
        %v361 = vld [vmem:[%s305 + $0x28] sm:$0xff]
        %v362 = vld [vmem:[%s305 + $0x30] sm:$0xff]
        %v363 = vld [vmem:[%s305 + $0x38] sm:$0xff]
        %v364 = vld [vmem:[%s305 + $0x40] sm:$0xff]
        %v365 = vld [vmem:[%s305 + $0x48] sm:$0xff]
        %v366 = vld [vmem:[%s305 + $0x50] sm:$0xff]
        %v367 = vld [vmem:[%s305 + $0x58] sm:$0xff]
        %v368 = vld [vmem:[%s305 + $0x60] sm:$0xff]
        %v369 = vld [vmem:[%s305 + $0x68] sm:$0xff]
        %v370 = vld [vmem:[%s305 + $0x70] sm:$0xff]
        %v371 = vld [vmem:[%s305 + $0x78] sm:$0xff]
        %v372 = vld [vmem:[%s305 + $0x80] sm:$0xff]
        %v373 = vld [vmem:[%s305 + $0x88] sm:$0xff]
        %v374 = vld [vmem:[%s305 + $0x90] sm:$0xff]
        %v375 = vld [vmem:[%s305 + $0x98] sm:$0xff]
        %v376 = vld [vmem:[%s305 + $0xa0] sm:$0xff]
        %v377 = vld [vmem:[%s305 + $0xa8] sm:$0xff]
        %v378 = vld [vmem:[%s305 + $0xb0] sm:$0xff]
        %v379 = vld [vmem:[%s305 + $0xb8] sm:$0xff]
        %v380 = vld [vmem:[%s305 + $0xc0] sm:$0xff]
        %v381 = vld [vmem:[%s305 + $0xc8] sm:$0xff]
        %v382 = vld [vmem:[%s305 + $0xd0] sm:$0xff]
        %v383 = vld [vmem:[%s305 + $0xd8] sm:$0xff]
        %v384 = vld [vmem:[%s305 + $0xe0] sm:$0xff]
        %v385 = vld [vmem:[%s305 + $0xe8] sm:$0xff]
        %v386 = vld [vmem:[%s305 + $0xf0] sm:$0xff]
        %v387 = vld [vmem:[%s305 + $0xf8] sm:$0xff]
        %v388 = vld [vmem:[%s305 + $0x100] sm:$0xff]
        %v389 = vld [vmem:[%s305 + $0x108] sm:$0xff]
        %v390 = vld [vmem:[%s305 + $0x110] sm:$0xff]
        %v391 = vld [vmem:[%s305 + $0x118] sm:$0xff]
        %v392 = vld [vmem:[%s305 + $0x120] sm:$0xff]
        %v393 = vld [vmem:[%s305 + $0x128] sm:$0xff]
        %v394 = vld [vmem:[%s305 + $0x130] sm:$0xff]
        %v395 = vld [vmem:[%s305 + $0x138] sm:$0xff]
        %v396 = vld [vmem:[%s305 + $0x140] sm:$0xff]
        %v397 = vld [vmem:[%s305 + $0x148] sm:$0xff]
        %v398 = vld [vmem:[%s305 + $0x150] sm:$0xff]
        %v399 = vld [vmem:[%s305 + $0x158] sm:$0xff]
        %v400 = vld [vmem:[%s305 + $0x160] sm:$0xff]
        %v401 = vld [vmem:[%s305 + $0x168] sm:$0xff]
        %v402 = vld [vmem:[%s305 + $0x170] sm:$0xff]
        %v403 = vld [vmem:[%s305 + $0x178] sm:$0xff]
        %v404 = vld [vmem:[%s305 + $0x180] sm:$0xff]
        %v405 = vld [vmem:[%s305 + $0x188] sm:$0xff]
        %v406 = vld [vmem:[%s305 + $0x190] sm:$0xff]
        %v407 = vld [vmem:[%s305 + $0x198] sm:$0xff]
        %v408 = vld [vmem:[%s305 + $0x1a0] sm:$0xff]
        %v409 = vld [vmem:[%s305 + $0x1a8] sm:$0xff]
        %v410 = vld [vmem:[%s305 + $0x1b0] sm:$0xff]
        %v411 = vld [vmem:[%s305 + $0x1b8] sm:$0xff]
        %v412 = vld [vmem:[%s305 + $0x1c0] sm:$0xff]
        %v413 = vld [vmem:[%s305 + $0x1c8] sm:$0xff]
        %v414 = vld [vmem:[%s305 + $0x1d0] sm:$0xff]
        %v415 = vld [vmem:[%s305 + $0x1d8] sm:$0xff]
        %v416 = vld [vmem:[%s305 + $0x1e0] sm:$0xff]
        %v417 = vld [vmem:[%s305 + $0x1e8] sm:$0xff]
        %v418 = vld [vmem:[%s305 + $0x1f0] sm:$0xff]
        %v419 = vld [vmem:[%s305 + $0x1f8] sm:$0xff]
        %v420 = vld [vmem:[%s305 + $0x200] sm:$0xff]
        %v421 = vld [vmem:[%s305 + $0x208] sm:$0xff]
        %v422 = vld [vmem:[%s305 + $0x210] sm:$0xff]
        %v423 = vld [vmem:[%s305 + $0x218] sm:$0xff]
        %v424 = vld [vmem:[%s305 + $0x220] sm:$0xff]
        %v425 = vld [vmem:[%s305 + $0x228] sm:$0xff]
        %v426 = vld [vmem:[%s305 + $0x230] sm:$0xff]
        %v427 = vld [vmem:[%s305 + $0x238] sm:$0xff]
        %v428 = vld [vmem:[%s305 + $0x240] sm:$0xff]
        %v429 = vld [vmem:[%s305 + $0x248] sm:$0xff]
        %v430 = vld [vmem:[%s305 + $0x250] sm:$0xff]
        %v431 = vld [vmem:[%s305 + $0x258] sm:$0xff]
        %v432 = vld [vmem:[%s305 + $0x260] sm:$0xff]
        %v433 = vld [vmem:[%s305 + $0x268] sm:$0xff]
        %v434 = vld [vmem:[%s305 + $0x270] sm:$0xff]
        %v435 = vld [vmem:[%s305 + $0x278] sm:$0xff]
        %v436 = vld [vmem:[%s305 + $0x280] sm:$0xff]
        %v437 = vld [vmem:[%s305 + $0x288] sm:$0xff]
        %v438 = vld [vmem:[%s305 + $0x290] sm:$0xff]
        %v439 = vld [vmem:[%s305 + $0x298] sm:$0xff]
        %v440 = vld [vmem:[%s305 + $0x2a0] sm:$0xff]
        %v441 = vld [vmem:[%s305 + $0x2a8] sm:$0xff]
        %v442 = vld [vmem:[%s305 + $0x2b0] sm:$0xff]
        %v443 = vld [vmem:[%s305 + $0x2b8] sm:$0xff]
        %v444 = vld [vmem:[%s305 + $0x2c0] sm:$0xff]
        %v445 = vld [vmem:[%s305 + $0x2c8] sm:$0xff]
        %v446 = vld [vmem:[%s305 + $0x2d0] sm:$0xff]
        %v447 = vld [vmem:[%s305 + $0x2d8] sm:$0xff]
        %v448 = vld [vmem:[%s305 + $0x2e0] sm:$0xff]
        %v449 = vld [vmem:[%s305 + $0x2e8] sm:$0xff]
        %v450 = vld [vmem:[%s305 + $0x2f0] sm:$0xff]
        %v451 = vld [vmem:[%s305 + $0x2f8] sm:$0xff]
        %v452 = vld [vmem:[%s305 + $0x300] sm:$0xff]
        %v453 = vld [vmem:[%s305 + $0x308] sm:$0xff]
        %v454 = vld [vmem:[%s305 + $0x310] sm:$0xff]
        %v455 = vld [vmem:[%s305 + $0x318] sm:$0xff]
        %v456 = vld [vmem:[%s305 + $0x320] sm:$0xff]
        %v457 = vld [vmem:[%s305 + $0x328] sm:$0xff]
        %v458 = vld [vmem:[%s305 + $0x330] sm:$0xff]
        %v459 = vld [vmem:[%s305 + $0x338] sm:$0xff]
        %v460 = vld [vmem:[%s305 + $0x340] sm:$0xff]
        %v461 = vld [vmem:[%s305 + $0x348] sm:$0xff]
        %v462 = vld [vmem:[%s305 + $0x350] sm:$0xff]
        %v463 = vld [vmem:[%s305 + $0x358] sm:$0xff]
        %v464 = vld [vmem:[%s305 + $0x360] sm:$0xff]
        %v465 = vld [vmem:[%s305 + $0x368] sm:$0xff]
        %v466 = vld [vmem:[%s305 + $0x370] sm:$0xff]
        %v467 = vld [vmem:[%s305 + $0x378] sm:$0xff]
        %v468 = vld [vmem:[%s305 + $0x380] sm:$0xff]
        %v469 = vld [vmem:[%s305 + $0x388] sm:$0xff]
        %v470 = vld [vmem:[%s305 + $0x390] sm:$0xff]
        %v471 = vld [vmem:[%s305 + $0x398] sm:$0xff]
        %v472 = vld [vmem:[%s305 + $0x3a0] sm:$0xff]
        %v473 = vld [vmem:[%s305 + $0x3a8] sm:$0xff]
        %v474 = vld [vmem:[%s305 + $0x3b0] sm:$0xff]
        %v475 = vld [vmem:[%s305 + $0x3b8] sm:$0xff]
        %v476 = vld [vmem:[%s305 + $0x3c0] sm:$0xff]
        %v477 = vld [vmem:[%s305 + $0x3c8] sm:$0xff]
        %v478 = vld [vmem:[%s305 + $0x3d0] sm:$0xff]
        %v479 = vld [vmem:[%s305 + $0x3d8] sm:$0xff]
        %v480 = vld [vmem:[%s305 + $0x3e0] sm:$0xff]
        %v481 = vld [vmem:[%s305 + $0x3e8] sm:$0xff]
        %v482 = vld [vmem:[%s305 + $0x3f0] sm:$0xff]
        %v483 = vld [vmem:[%s305 + $0x3f8] sm:$0xff]
        %v486 = vunpack.c.l.b16 %v354
        %v487 = vunpack.c.h.b16 %v354
        %v488 = vunpack.c.l.b16 %v355
        %v489 = vunpack.c.h.b16 %v355
        %v490 = vpack.c.b16 %v486, %v486
        %v491 = vpack.c.b16 %v487, %v487
        %v492 = vpack.c.b16 %v488, %v488
        %v493 = vpack.c.b16 %v489, %v489
        %v626 = vunpack.c.l.b16 %v356
        %v627 = vunpack.c.h.b16 %v356
        %v628 = vunpack.c.l.b16 %v357
        %v629 = vunpack.c.h.b16 %v357
        %v630 = vunpack.c.l.b16 %v358
        %v631 = vunpack.c.h.b16 %v358
        %v632 = vunpack.c.l.b16 %v359
        %v633 = vunpack.c.h.b16 %v359
        %v634 = vunpack.c.l.b16 %v360
        %v635 = vunpack.c.h.b16 %v360
        %v636 = vunpack.c.l.b16 %v361
        %v637 = vunpack.c.h.b16 %v361
        %v638 = vunpack.c.l.b16 %v362
        %v639 = vunpack.c.h.b16 %v362
        %v640 = vunpack.c.l.b16 %v363
        %v641 = vunpack.c.h.b16 %v363
        %v642 = vunpack.c.l.b16 %v364
        %v643 = vunpack.c.h.b16 %v364
        %v644 = vunpack.c.l.b16 %v365
        %v645 = vunpack.c.h.b16 %v365
        %v646 = vunpack.c.l.b16 %v366
        %v647 = vunpack.c.h.b16 %v366
        %v648 = vunpack.c.l.b16 %v367
        %v649 = vunpack.c.h.b16 %v367
        %v650 = vunpack.c.l.b16 %v368
        %v651 = vunpack.c.h.b16 %v368
        %v652 = vunpack.c.l.b16 %v369
        %v653 = vunpack.c.h.b16 %v369
        %v654 = vunpack.c.l.b16 %v370
        %v655 = vunpack.c.h.b16 %v370
        %v656 = vunpack.c.l.b16 %v371
        %v657 = vunpack.c.h.b16 %v371
        %v658 = vunpack.c.l.b16 %v372
        %v659 = vunpack.c.h.b16 %v372
        %v660 = vunpack.c.l.b16 %v373
        %v661 = vunpack.c.h.b16 %v373
        %v662 = vunpack.c.l.b16 %v374
        %v663 = vunpack.c.h.b16 %v374
        %v664 = vunpack.c.l.b16 %v375
        %v665 = vunpack.c.h.b16 %v375
        %v666 = vunpack.c.l.b16 %v376
        %v667 = vunpack.c.h.b16 %v376
        %v668 = vunpack.c.l.b16 %v377
        %v669 = vunpack.c.h.b16 %v377
        %v670 = vunpack.c.l.b16 %v378
        %v671 = vunpack.c.h.b16 %v378
        %v672 = vunpack.c.l.b16 %v379
        %v673 = vunpack.c.h.b16 %v379
        %v674 = vunpack.c.l.b16 %v380
        %v675 = vunpack.c.h.b16 %v380
        %v676 = vunpack.c.l.b16 %v381
        %v677 = vunpack.c.h.b16 %v381
        %v678 = vunpack.c.l.b16 %v382
        %v679 = vunpack.c.h.b16 %v382
        %v680 = vunpack.c.l.b16 %v383
        %v681 = vunpack.c.h.b16 %v383
        %v682 = vunpack.c.l.b16 %v384
        %v683 = vunpack.c.h.b16 %v384
        %v684 = vunpack.c.l.b16 %v385
        %v685 = vunpack.c.h.b16 %v385
        %v686 = vunpack.c.l.b16 %v386
        %v687 = vunpack.c.h.b16 %v386
        %v688 = vunpack.c.l.b16 %v387
        %v689 = vunpack.c.h.b16 %v387
        %v690 = vunpack.c.l.b16 %v388
        %v691 = vunpack.c.h.b16 %v388
        %v692 = vunpack.c.l.b16 %v389
        %v693 = vunpack.c.h.b16 %v389
        %v694 = vunpack.c.l.b16 %v390
        %v695 = vunpack.c.h.b16 %v390
        %v696 = vunpack.c.l.b16 %v391
        %v697 = vunpack.c.h.b16 %v391
        %v698 = vunpack.c.l.b16 %v392
        %v699 = vunpack.c.h.b16 %v392
        %v700 = vunpack.c.l.b16 %v393
        %v701 = vunpack.c.h.b16 %v393
        %v702 = vunpack.c.l.b16 %v394
        %v703 = vunpack.c.h.b16 %v394
        %v704 = vunpack.c.l.b16 %v395
        %v705 = vunpack.c.h.b16 %v395
        %v706 = vunpack.c.l.b16 %v396
        %v707 = vunpack.c.h.b16 %v396
        %v708 = vunpack.c.l.b16 %v397
        %v709 = vunpack.c.h.b16 %v397
        %v710 = vunpack.c.l.b16 %v398
        %v711 = vunpack.c.h.b16 %v398
        %v712 = vunpack.c.l.b16 %v399
        %v713 = vunpack.c.h.b16 %v399
        %v714 = vunpack.c.l.b16 %v400
        %v715 = vunpack.c.h.b16 %v400
        %v716 = vunpack.c.l.b16 %v401
        %v717 = vunpack.c.h.b16 %v401
        %v718 = vunpack.c.l.b16 %v402
        %v719 = vunpack.c.h.b16 %v402
        %v720 = vunpack.c.l.b16 %v403
        %v721 = vunpack.c.h.b16 %v403
        %v722 = vunpack.c.l.b16 %v404
        %v723 = vunpack.c.h.b16 %v404
        %v724 = vunpack.c.l.b16 %v405
        %v725 = vunpack.c.h.b16 %v405
        %v726 = vunpack.c.l.b16 %v406
        %v727 = vunpack.c.h.b16 %v406
        %v728 = vunpack.c.l.b16 %v407
        %v729 = vunpack.c.h.b16 %v407
        %v730 = vunpack.c.l.b16 %v408
        %v731 = vunpack.c.h.b16 %v408
        %v732 = vunpack.c.l.b16 %v409
        %v733 = vunpack.c.h.b16 %v409
        %v734 = vunpack.c.l.b16 %v410
        %v735 = vunpack.c.h.b16 %v410
        %v736 = vunpack.c.l.b16 %v411
        %v737 = vunpack.c.h.b16 %v411
        %v738 = vunpack.c.l.b16 %v412
        %v739 = vunpack.c.h.b16 %v412
        %v740 = vunpack.c.l.b16 %v413
        %v741 = vunpack.c.h.b16 %v413
        %v742 = vunpack.c.l.b16 %v414
        %v743 = vunpack.c.h.b16 %v414
        %v744 = vunpack.c.l.b16 %v415
        %v745 = vunpack.c.h.b16 %v415
        %v746 = vunpack.c.l.b16 %v416
        %v747 = vunpack.c.h.b16 %v416
        %v748 = vunpack.c.l.b16 %v417
        %v749 = vunpack.c.h.b16 %v417
        %v750 = vunpack.c.l.b16 %v418
        %v751 = vunpack.c.h.b16 %v418
        %v752 = vunpack.c.l.b16 %v419
        %v753 = vunpack.c.h.b16 %v419
        %v754 = vunpack.c.l.b16 %v420
        %v755 = vunpack.c.h.b16 %v420
        %v756 = vunpack.c.l.b16 %v421
        %v757 = vunpack.c.h.b16 %v421
        %v758 = vunpack.c.l.b16 %v422
        %v759 = vunpack.c.h.b16 %v422
        %v760 = vunpack.c.l.b16 %v423
        %v761 = vunpack.c.h.b16 %v423
        %v762 = vunpack.c.l.b16 %v424
        %v763 = vunpack.c.h.b16 %v424
        %v764 = vunpack.c.l.b16 %v425
        %v765 = vunpack.c.h.b16 %v425
        %v766 = vunpack.c.l.b16 %v426
        %v767 = vunpack.c.h.b16 %v426
        %v768 = vunpack.c.l.b16 %v427
        %v769 = vunpack.c.h.b16 %v427
        %v770 = vunpack.c.l.b16 %v428
        %v771 = vunpack.c.h.b16 %v428
        %v772 = vunpack.c.l.b16 %v429
        %v773 = vunpack.c.h.b16 %v429
        %v774 = vunpack.c.l.b16 %v430
        %v775 = vunpack.c.h.b16 %v430
        %v776 = vunpack.c.l.b16 %v431
        %v777 = vunpack.c.h.b16 %v431
        %v778 = vunpack.c.l.b16 %v432
        %v779 = vunpack.c.h.b16 %v432
        %v780 = vunpack.c.l.b16 %v433
        %v781 = vunpack.c.h.b16 %v433
        %v782 = vunpack.c.l.b16 %v434
        %v783 = vunpack.c.h.b16 %v434
        %v784 = vunpack.c.l.b16 %v435
        %v785 = vunpack.c.h.b16 %v435
        %v786 = vunpack.c.l.b16 %v436
        %v787 = vunpack.c.h.b16 %v436
        %v788 = vunpack.c.l.b16 %v437
        %v789 = vunpack.c.h.b16 %v437
        %v790 = vunpack.c.l.b16 %v438
        %v791 = vunpack.c.h.b16 %v438
        %v792 = vunpack.c.l.b16 %v439
        %v793 = vunpack.c.h.b16 %v439
        %v794 = vunpack.c.l.b16 %v440
        %v795 = vunpack.c.h.b16 %v440
        %v796 = vunpack.c.l.b16 %v441
        %v797 = vunpack.c.h.b16 %v441
        %v798 = vunpack.c.l.b16 %v442
        %v799 = vunpack.c.h.b16 %v442
        %v800 = vunpack.c.l.b16 %v443
        %v801 = vunpack.c.h.b16 %v443
        %v802 = vunpack.c.l.b16 %v444
        %v803 = vunpack.c.h.b16 %v444
        %v804 = vunpack.c.l.b16 %v445
        %v805 = vunpack.c.h.b16 %v445
        %v806 = vunpack.c.l.b16 %v446
        %v807 = vunpack.c.h.b16 %v446
        %v808 = vunpack.c.l.b16 %v447
        %v809 = vunpack.c.h.b16 %v447
        %v810 = vunpack.c.l.b16 %v448
        %v811 = vunpack.c.h.b16 %v448
        %v812 = vunpack.c.l.b16 %v449
        %v813 = vunpack.c.h.b16 %v449
        %v814 = vunpack.c.l.b16 %v450
        %v815 = vunpack.c.h.b16 %v450
        %v816 = vunpack.c.l.b16 %v451
        %v817 = vunpack.c.h.b16 %v451
        %v818 = vunpack.c.l.b16 %v452
        %v819 = vunpack.c.h.b16 %v452
        %v820 = vunpack.c.l.b16 %v453
        %v821 = vunpack.c.h.b16 %v453
        %v822 = vunpack.c.l.b16 %v454
        %v823 = vunpack.c.h.b16 %v454
        %v824 = vunpack.c.l.b16 %v455
        %v825 = vunpack.c.h.b16 %v455
        %v826 = vunpack.c.l.b16 %v456
        %v827 = vunpack.c.h.b16 %v456
        %v828 = vunpack.c.l.b16 %v457
        %v829 = vunpack.c.h.b16 %v457
        %v830 = vunpack.c.l.b16 %v458
        %v831 = vunpack.c.h.b16 %v458
        %v832 = vunpack.c.l.b16 %v459
        %v833 = vunpack.c.h.b16 %v459
        %v834 = vunpack.c.l.b16 %v460
        %v835 = vunpack.c.h.b16 %v460
        %v836 = vunpack.c.l.b16 %v461
        %v837 = vunpack.c.h.b16 %v461
        %v838 = vunpack.c.l.b16 %v462
        %v839 = vunpack.c.h.b16 %v462
        %v840 = vunpack.c.l.b16 %v463
        %v841 = vunpack.c.h.b16 %v463
        %v842 = vunpack.c.l.b16 %v464
        %v843 = vunpack.c.h.b16 %v464
        %v844 = vunpack.c.l.b16 %v465
        %v845 = vunpack.c.h.b16 %v465
        %v846 = vunpack.c.l.b16 %v466
        %v847 = vunpack.c.h.b16 %v466
        %v848 = vunpack.c.l.b16 %v467
        %v849 = vunpack.c.h.b16 %v467
        %v850 = vunpack.c.l.b16 %v468
        %v851 = vunpack.c.h.b16 %v468
        %v852 = vunpack.c.l.b16 %v469
        %v853 = vunpack.c.h.b16 %v469
        %v854 = vunpack.c.l.b16 %v470
        %v855 = vunpack.c.h.b16 %v470
        %v856 = vunpack.c.l.b16 %v471
        %v857 = vunpack.c.h.b16 %v471
        %v858 = vunpack.c.l.b16 %v472
        %v859 = vunpack.c.h.b16 %v472
        %v860 = vunpack.c.l.b16 %v473
        %v861 = vunpack.c.h.b16 %v473
        %v862 = vunpack.c.l.b16 %v474
        %v863 = vunpack.c.h.b16 %v474
        %v864 = vunpack.c.l.b16 %v475
        %v865 = vunpack.c.h.b16 %v475
        %v866 = vunpack.c.l.b16 %v476
        %v867 = vunpack.c.h.b16 %v476
        %v868 = vunpack.c.l.b16 %v477
        %v869 = vunpack.c.h.b16 %v477
        %v870 = vunpack.c.l.b16 %v478
        %v871 = vunpack.c.h.b16 %v478
        %v872 = vunpack.c.l.b16 %v479
        %v873 = vunpack.c.h.b16 %v479
        %v874 = vunpack.c.l.b16 %v480
        %v875 = vunpack.c.h.b16 %v480
        %v876 = vunpack.c.l.b16 %v481
        %v877 = vunpack.c.h.b16 %v481
        %v878 = vunpack.c.l.b16 %v482
        %v879 = vunpack.c.h.b16 %v482
        %v880 = vunpack.c.l.b16 %v483
        %v881 = vunpack.c.h.b16 %v483
        %v882 = vpack.c.b16 %v630, %v626
        %v883 = vpack.c.b16 %v631, %v627
        %v884 = vpack.c.b16 %v632, %v628
        %v885 = vpack.c.b16 %v633, %v629
        %v886 = vpack.c.b16 %v638, %v634
        %v887 = vpack.c.b16 %v639, %v635
        %v888 = vpack.c.b16 %v640, %v636
        %v889 = vpack.c.b16 %v641, %v637
        %v890 = vpack.c.b16 %v646, %v642
        %v891 = vpack.c.b16 %v647, %v643
        %v892 = vpack.c.b16 %v648, %v644
        %v893 = vpack.c.b16 %v649, %v645
        %v894 = vpack.c.b16 %v654, %v650
        %v895 = vpack.c.b16 %v655, %v651
        %v896 = vpack.c.b16 %v656, %v652
        %v897 = vpack.c.b16 %v657, %v653
        %v898 = vpack.c.b16 %v662, %v658
        %v899 = vpack.c.b16 %v663, %v659
        %v900 = vpack.c.b16 %v664, %v660
        %v901 = vpack.c.b16 %v665, %v661
        %v902 = vpack.c.b16 %v670, %v666
        %v903 = vpack.c.b16 %v671, %v667
        %v904 = vpack.c.b16 %v672, %v668
        %v905 = vpack.c.b16 %v673, %v669
        %v906 = vpack.c.b16 %v678, %v674
        %v907 = vpack.c.b16 %v679, %v675
        %v908 = vpack.c.b16 %v680, %v676
        %v909 = vpack.c.b16 %v681, %v677
        %v910 = vpack.c.b16 %v686, %v682
        %v911 = vpack.c.b16 %v687, %v683
        %v912 = vpack.c.b16 %v688, %v684
        %v913 = vpack.c.b16 %v689, %v685
        %v914 = vpack.c.b16 %v694, %v690
        %v915 = vpack.c.b16 %v695, %v691
        %v916 = vpack.c.b16 %v696, %v692
        %v917 = vpack.c.b16 %v697, %v693
        %v918 = vpack.c.b16 %v702, %v698
        %v919 = vpack.c.b16 %v703, %v699
        %v920 = vpack.c.b16 %v704, %v700
        %v921 = vpack.c.b16 %v705, %v701
        %v922 = vpack.c.b16 %v710, %v706
        %v923 = vpack.c.b16 %v711, %v707
        %v924 = vpack.c.b16 %v712, %v708
        %v925 = vpack.c.b16 %v713, %v709
        %v926 = vpack.c.b16 %v718, %v714
        %v927 = vpack.c.b16 %v719, %v715
        %v928 = vpack.c.b16 %v720, %v716
        %v929 = vpack.c.b16 %v721, %v717
        %v930 = vpack.c.b16 %v726, %v722
        %v931 = vpack.c.b16 %v727, %v723
        %v932 = vpack.c.b16 %v728, %v724
        %v933 = vpack.c.b16 %v729, %v725
        %v934 = vpack.c.b16 %v734, %v730
        %v935 = vpack.c.b16 %v735, %v731
        %v936 = vpack.c.b16 %v736, %v732
        %v937 = vpack.c.b16 %v737, %v733
        %v938 = vpack.c.b16 %v742, %v738
        %v939 = vpack.c.b16 %v743, %v739
        %v940 = vpack.c.b16 %v744, %v740
        %v941 = vpack.c.b16 %v745, %v741
        %v942 = vpack.c.b16 %v750, %v746
        %v943 = vpack.c.b16 %v751, %v747
        %v944 = vpack.c.b16 %v752, %v748
        %v945 = vpack.c.b16 %v753, %v749
        %v946 = vpack.c.b16 %v758, %v754
        %v947 = vpack.c.b16 %v759, %v755
        %v948 = vpack.c.b16 %v760, %v756
        %v949 = vpack.c.b16 %v761, %v757
        %v950 = vpack.c.b16 %v766, %v762
        %v951 = vpack.c.b16 %v767, %v763
        %v952 = vpack.c.b16 %v768, %v764
        %v953 = vpack.c.b16 %v769, %v765
        %v954 = vpack.c.b16 %v774, %v770
        %v955 = vpack.c.b16 %v775, %v771
        %v956 = vpack.c.b16 %v776, %v772
        %v957 = vpack.c.b16 %v777, %v773
        %v958 = vpack.c.b16 %v782, %v778
        %v959 = vpack.c.b16 %v783, %v779
        %v960 = vpack.c.b16 %v784, %v780
        %v961 = vpack.c.b16 %v785, %v781
        %v962 = vpack.c.b16 %v790, %v786
        %v963 = vpack.c.b16 %v791, %v787
        %v964 = vpack.c.b16 %v792, %v788
        %v965 = vpack.c.b16 %v793, %v789
        %v966 = vpack.c.b16 %v798, %v794
        %v967 = vpack.c.b16 %v799, %v795
        %v968 = vpack.c.b16 %v800, %v796
        %v969 = vpack.c.b16 %v801, %v797
        %v970 = vpack.c.b16 %v806, %v802
        %v971 = vpack.c.b16 %v807, %v803
        %v972 = vpack.c.b16 %v808, %v804
        %v973 = vpack.c.b16 %v809, %v805
        %v974 = vpack.c.b16 %v814, %v810
        %v975 = vpack.c.b16 %v815, %v811
        %v976 = vpack.c.b16 %v816, %v812
        %v977 = vpack.c.b16 %v817, %v813
        %v978 = vpack.c.b16 %v822, %v818
        %v979 = vpack.c.b16 %v823, %v819
        %v980 = vpack.c.b16 %v824, %v820
        %v981 = vpack.c.b16 %v825, %v821
        %v982 = vpack.c.b16 %v830, %v826
        %v983 = vpack.c.b16 %v831, %v827
        %v984 = vpack.c.b16 %v832, %v828
        %v985 = vpack.c.b16 %v833, %v829
        %v986 = vpack.c.b16 %v838, %v834
        %v987 = vpack.c.b16 %v839, %v835
        %v988 = vpack.c.b16 %v840, %v836
        %v989 = vpack.c.b16 %v841, %v837
        %v990 = vpack.c.b16 %v846, %v842
        %v991 = vpack.c.b16 %v847, %v843
        %v992 = vpack.c.b16 %v848, %v844
        %v993 = vpack.c.b16 %v849, %v845
        %v994 = vpack.c.b16 %v854, %v850
        %v995 = vpack.c.b16 %v855, %v851
        %v996 = vpack.c.b16 %v856, %v852
        %v997 = vpack.c.b16 %v857, %v853
        %v998 = vpack.c.b16 %v862, %v858
        %v999 = vpack.c.b16 %v863, %v859
        %v1000 = vpack.c.b16 %v864, %v860
        %v1001 = vpack.c.b16 %v865, %v861
        %v1002 = vpack.c.b16 %v870, %v866
        %v1003 = vpack.c.b16 %v871, %v867
        %v1004 = vpack.c.b16 %v872, %v868
        %v1005 = vpack.c.b16 %v873, %v869
        %v1006 = vpack.c.b16 %v878, %v874
        %v1007 = vpack.c.b16 %v879, %v875
        %v1008 = vpack.c.b16 %v880, %v876
        %v1009 = vpack.c.b16 %v881, %v877
        %1138 = vmatprep.subr.bf16.mxu0 %v911
        %1139 = vmatpush1.bf16.msra.mxu0 %v910
        %1140 = vmatprep.subr.bf16.mxu0 %v907
        %1141 = vmatpush1.bf16.msra.mxu0 %v906
        %1142 = vmatprep.subr.bf16.mxu0 %v903
        %1143 = vmatpush1.bf16.msra.mxu0 %v902
        %1144 = vmatprep.subr.bf16.mxu0 %v899
        %1145 = vmatpush1.bf16.msra.mxu0 %v898
        %1146 = vmatprep.subr.bf16.mxu0 %v895
        %1147 = vmatpush1.bf16.msra.mxu0 %v894
        %1148 = vmatprep.subr.bf16.mxu0 %v891
        %1149 = vmatpush1.bf16.msra.mxu0 %v890
        %1150 = vmatprep.subr.bf16.mxu0 %v887
        %1151 = vmatpush1.bf16.msra.mxu0 %v886
        %1152 = vmatprep.subr.bf16.mxu0 %v883
        %1153 = vmatpush1.bf16.msra.mxu0 %v882
        %1154 = vmatprep.subr.bf16.mxu0 %v943
        %1155 = vmatpush2.bf16.msra.mxu0 %v942
        %1156 = vmatprep.subr.bf16.mxu0 %v939
        %1157 = vmatpush2.bf16.msra.mxu0 %v938
        %1158 = vmatprep.subr.bf16.mxu0 %v935
        %1159 = vmatpush2.bf16.msra.mxu0 %v934
        %1160 = vmatprep.subr.bf16.mxu0 %v931
        %1161 = vmatpush2.bf16.msra.mxu0 %v930
        %1162 = vmatprep.subr.bf16.mxu0 %v927
        %1163 = vmatpush2.bf16.msra.mxu0 %v926
        %1164 = vmatprep.subr.bf16.mxu0 %v923
        %1165 = vmatpush2.bf16.msra.mxu0 %v922
        %1166 = vmatprep.subr.bf16.mxu0 %v919
        %1167 = vmatpush2.bf16.msra.mxu0 %v918
        %1168 = vmatprep.subr.bf16.mxu0 %v915
        %1169 = vmatpush2.bf16.msra.mxu0 %v914
        %1170 = vmatprep.mubr.bf16.mxu0 %v491
        %1171 = vmatmul.mubr.bf16.gmra.mxu0 %v490
        %v1172 = vpop.f32.mrf.mxu0
        %v1173 = vadd.f32 0.0, %v1172
        %v1174 = vpop.f32.mrf.mxu0
        %v1175 = vadd.f32 0.0, %v1174
        %v1176 = vpop.f32.mrf.mxu0
        %v1177 = vpop.f32.mrf.mxu0
        %1178 = vdwg.mxu0
        %1179 = vmatprep.subr.bf16.mxu0 %v975
        %1180 = vmatpush1.bf16.msra.mxu0 %v974
        %1181 = vmatprep.subr.bf16.mxu0 %v971
        %1182 = vmatpush1.bf16.msra.mxu0 %v970
        %1183 = vmatprep.subr.bf16.mxu0 %v967
        %1184 = vmatpush1.bf16.msra.mxu0 %v966
        %1185 = vmatprep.subr.bf16.mxu0 %v963
        %1186 = vmatpush1.bf16.msra.mxu0 %v962
        %1187 = vmatprep.subr.bf16.mxu0 %v959
        %1188 = vmatpush1.bf16.msra.mxu0 %v958
        %1189 = vmatprep.subr.bf16.mxu0 %v955
        %1190 = vmatpush1.bf16.msra.mxu0 %v954
        %1191 = vmatprep.subr.bf16.mxu0 %v951
        %1192 = vmatpush1.bf16.msra.mxu0 %v950
        %1193 = vmatprep.subr.bf16.mxu0 %v947
        %1194 = vmatpush1.bf16.msra.mxu0 %v946
        %1195 = vmatprep.subr.bf16.mxu0 %v1007
        %1196 = vmatpush2.bf16.msra.mxu0 %v1006
        %1197 = vmatprep.subr.bf16.mxu0 %v1003
        %1198 = vmatpush2.bf16.msra.mxu0 %v1002
        %1199 = vmatprep.subr.bf16.mxu0 %v999
        %1200 = vmatpush2.bf16.msra.mxu0 %v998
        %1201 = vmatprep.subr.bf16.mxu0 %v995
        %1202 = vmatpush2.bf16.msra.mxu0 %v994
        %1203 = vmatprep.subr.bf16.mxu0 %v991
        %1204 = vmatpush2.bf16.msra.mxu0 %v990
        %1205 = vmatprep.subr.bf16.mxu0 %v987
        %1206 = vmatpush2.bf16.msra.mxu0 %v986
        %1207 = vmatprep.subr.bf16.mxu0 %v983
        %1208 = vmatpush2.bf16.msra.mxu0 %v982
        %1209 = vmatprep.subr.bf16.mxu0 %v979
        %1210 = vmatpush2.bf16.msra.mxu0 %v978
        %1211 = vmatprep.mubr.bf16.mxu0 %v493
        %1212 = vmatmul.mubr.bf16.gmra.mxu0 %v492
        %v1213 = vpop.f32.mrf.mxu0
        %v1214 = vadd.f32 %v1173, %v1213
        %v1215 = vpop.f32.mrf.mxu0
        %v1216 = vadd.f32 %v1175, %v1215
        %v1217 = vpop.f32.mrf.mxu0
        %v1218 = vpop.f32.mrf.mxu0
        %1219 = vdwg.mxu0
        %1220 = vmatprep.subr.bf16.mxu0 %v913
        %1221 = vmatpush1.bf16.msra.mxu0 %v912
        %1222 = vmatprep.subr.bf16.mxu0 %v909
        %1223 = vmatpush1.bf16.msra.mxu0 %v908
        %1224 = vmatprep.subr.bf16.mxu0 %v905
        %1225 = vmatpush1.bf16.msra.mxu0 %v904
        %1226 = vmatprep.subr.bf16.mxu0 %v901
        %1227 = vmatpush1.bf16.msra.mxu0 %v900
        %1228 = vmatprep.subr.bf16.mxu0 %v897
        %1229 = vmatpush1.bf16.msra.mxu0 %v896
        %1230 = vmatprep.subr.bf16.mxu0 %v893
        %1231 = vmatpush1.bf16.msra.mxu0 %v892
        %1232 = vmatprep.subr.bf16.mxu0 %v889
        %1233 = vmatpush1.bf16.msra.mxu0 %v888
        %1234 = vmatprep.subr.bf16.mxu0 %v885
        %1235 = vmatpush1.bf16.msra.mxu0 %v884
        %1236 = vmatprep.subr.bf16.mxu0 %v945
        %1237 = vmatpush2.bf16.msra.mxu0 %v944
        %1238 = vmatprep.subr.bf16.mxu0 %v941
        %1239 = vmatpush2.bf16.msra.mxu0 %v940
        %1240 = vmatprep.subr.bf16.mxu0 %v937
        %1241 = vmatpush2.bf16.msra.mxu0 %v936
        %1242 = vmatprep.subr.bf16.mxu0 %v933
        %1243 = vmatpush2.bf16.msra.mxu0 %v932
        %1244 = vmatprep.subr.bf16.mxu0 %v929
        %1245 = vmatpush2.bf16.msra.mxu0 %v928
        %1246 = vmatprep.subr.bf16.mxu0 %v925
        %1247 = vmatpush2.bf16.msra.mxu0 %v924
        %1248 = vmatprep.subr.bf16.mxu0 %v921
        %1249 = vmatpush2.bf16.msra.mxu0 %v920
        %1250 = vmatprep.subr.bf16.mxu0 %v917
        %1251 = vmatpush2.bf16.msra.mxu0 %v916
        %1252 = vmatprep.mubr.bf16.mxu0 %v491
        %1253 = vmatmul.mubr.bf16.gmra.mxu0 %v490
        %v1254 = vpop.f32.mrf.mxu0
        %v1255 = vadd.f32 0.0, %v1254
        %v1256 = vpop.f32.mrf.mxu0
        %v1257 = vadd.f32 0.0, %v1256
        %v1258 = vpop.f32.mrf.mxu0
        %v1259 = vpop.f32.mrf.mxu0
        %1260 = vdwg.mxu0
        %1261 = vmatprep.subr.bf16.mxu0 %v977
        %1262 = vmatpush1.bf16.msra.mxu0 %v976
        %1263 = vmatprep.subr.bf16.mxu0 %v973
        %1264 = vmatpush1.bf16.msra.mxu0 %v972
        %1265 = vmatprep.subr.bf16.mxu0 %v969
        %1266 = vmatpush1.bf16.msra.mxu0 %v968
        %1267 = vmatprep.subr.bf16.mxu0 %v965
        %1268 = vmatpush1.bf16.msra.mxu0 %v964
        %1269 = vmatprep.subr.bf16.mxu0 %v961
        %1270 = vmatpush1.bf16.msra.mxu0 %v960
        %1271 = vmatprep.subr.bf16.mxu0 %v957
        %1272 = vmatpush1.bf16.msra.mxu0 %v956
        %1273 = vmatprep.subr.bf16.mxu0 %v953
        %1274 = vmatpush1.bf16.msra.mxu0 %v952
        %1275 = vmatprep.subr.bf16.mxu0 %v949
        %1276 = vmatpush1.bf16.msra.mxu0 %v948
        %1277 = vmatprep.subr.bf16.mxu0 %v1009
        %1278 = vmatpush2.bf16.msra.mxu0 %v1008
        %1279 = vmatprep.subr.bf16.mxu0 %v1005
        %1280 = vmatpush2.bf16.msra.mxu0 %v1004
        %1281 = vmatprep.subr.bf16.mxu0 %v1001
        %1282 = vmatpush2.bf16.msra.mxu0 %v1000
        %1283 = vmatprep.subr.bf16.mxu0 %v997
        %1284 = vmatpush2.bf16.msra.mxu0 %v996
        %1285 = vmatprep.subr.bf16.mxu0 %v993
        %1286 = vmatpush2.bf16.msra.mxu0 %v992
        %1287 = vmatprep.subr.bf16.mxu0 %v989
        %1288 = vmatpush2.bf16.msra.mxu0 %v988
        %1289 = vmatprep.subr.bf16.mxu0 %v985
        %1290 = vmatpush2.bf16.msra.mxu0 %v984
        %1291 = vmatprep.subr.bf16.mxu0 %v981
        %1292 = vmatpush2.bf16.msra.mxu0 %v980
        %1293 = vmatprep.mubr.bf16.mxu0 %v493
        %1294 = vmatmul.mubr.bf16.gmra.mxu0 %v492
        %v1295 = vpop.f32.mrf.mxu0
        %v1296 = vadd.f32 %v1255, %v1295
        %v1297 = vpop.f32.mrf.mxu0
        %v1298 = vadd.f32 %v1257, %v1297
        %v1299 = vpop.f32.mrf.mxu0
        %v1300 = vpop.f32.mrf.mxu0
        %1301 = vdwg.mxu0
        %v1302 = vadd.f32 %v350, %v1214
        %v1303 = vadd.f32 %v351, %v1216
        %v1304 = vadd.f32 %v352, %v1296
        %v1305 = vadd.f32 %v353, %v1298
        %1306 = vst [vmem:[#allocation2] sm:$0xff] %v1302
        %1307 = vst [vmem:[#allocation2 + $0x8] sm:$0xff] %v1303
        %1308 = vst [vmem:[#allocation2 + $0x10] sm:$0xff] %v1304
        %1309 = vst [vmem:[#allocation2 + $0x18] sm:$0xff] %v1305
        %p1310 = scmp.eq.s32.totalorder %s27, 1
        // Predicated region
        $region65: #{tpu_custom_call.1} parent=47 // pred_check
          %p1311 = pneg %p1310
        $region66: #{tpu_custom_call.1} parent=47 // pred_check_branch
          %1313 = sbr.rel (%p1311) target = $region68
        $region67: #{tpu_custom_call.1} parent=47 // pred_region
          %v1314 = vld [vmem:[#allocation2] sm:$0xff]
          %v1315 = vld [vmem:[#allocation2 + $0x8] sm:$0xff]
          %v1316 = vld [vmem:[#allocation2 + $0x10] sm:$0xff]
          %v1317 = vld [vmem:[#allocation2 + $0x18] sm:$0xff]
          %v1318 = vld [vmem:[%s2] sm:$0xf]
          %v1320 = vlaneseq
          %v1321 = vshrl.u32 %v1320, 7
          %v1322 = vsub.s32 0, %v1321
          %v1323 = vrot.slane %v1318, %v1322
          %v1324 = vlaneseq
          %v1325 = vshrl.u32 %v1324, 7
          %v1326 = vsub.s32 1, %v1325
          %v1327 = vrot.slane %v1318, %v1326
          %v1328 = vlaneseq
          %v1329 = vshrl.u32 %v1328, 7
          %v1330 = vsub.s32 2, %v1329
          %v1331 = vrot.slane %v1318, %v1330
          %v1332 = vlaneseq
          %v1333 = vshrl.u32 %v1332, 7
          %v1334 = vsub.s32 3, %v1333
          %v1335 = vrot.slane %v1318, %v1334
          %v1340 = vadd.f32 %v1314, %v1323
          %v1341 = vadd.f32 %v1315, %v1327
          %v1342 = vadd.f32 %v1316, %v1331
          %v1343 = vadd.f32 %v1317, %v1335
          %vm1344 = vcmp.gt.f32.partialorder %v1340, 0.0
          %vm1345 = vcmp.gt.f32.partialorder %v1341, 0.0
          %vm1346 = vcmp.gt.f32.partialorder %v1342, 0.0
          %vm1347 = vcmp.gt.f32.partialorder %v1343, 0.0
          %v1348 = vmul.f32 %v1340, 0.2
          %v1349 = vmul.f32 %v1341, 0.2
          %v1350 = vmul.f32 %v1342, 0.2
          %v1351 = vmul.f32 %v1343, 0.2
          %v1352 = vsel %vm1344, %v1340, %v1348
          %v1353 = vsel %vm1345, %v1341, %v1349
          %v1354 = vsel %vm1346, %v1342, %v1350
          %v1355 = vsel %vm1347, %v1343, %v1351
          %v1356 = vpack.c.bf16 %v1352, %v1352
          %v1357 = vpack.c.bf16 %v1353, %v1353
          %v1358 = vpack.c.bf16 %v1354, %v1354
          %v1359 = vpack.c.bf16 %v1355, %v1355
          %v1360 = vld [vmem:[#allocation9] sm:$0xff]
          %v1361 = vld [vmem:[#allocation9 + $0x8] sm:$0xff]
          %v1362 = vld [vmem:[#allocation9 + $0x10] sm:$0xff]
          %v1363 = vld [vmem:[#allocation9 + $0x18] sm:$0xff]
          %v1364 = vld [vmem:[#allocation9 + $0x20] sm:$0xff]
          %v1365 = vld [vmem:[#allocation9 + $0x28] sm:$0xff]
          %v1366 = vld [vmem:[#allocation9 + $0x30] sm:$0xff]
          %v1367 = vld [vmem:[#allocation9 + $0x38] sm:$0xff]
          %v1368 = vld [vmem:[#allocation9 + $0x40] sm:$0xff]
          %v1369 = vld [vmem:[#allocation9 + $0x48] sm:$0xff]
          %v1370 = vld [vmem:[#allocation9 + $0x50] sm:$0xff]
          %v1371 = vld [vmem:[#allocation9 + $0x58] sm:$0xff]
          %v1372 = vld [vmem:[#allocation9 + $0x60] sm:$0xff]
          %v1373 = vld [vmem:[#allocation9 + $0x68] sm:$0xff]
          %v1374 = vld [vmem:[#allocation9 + $0x70] sm:$0xff]
          %v1375 = vld [vmem:[#allocation9 + $0x78] sm:$0xff]
          %v1376 = vld [vmem:[#allocation9 + $0x80] sm:$0xff]
          %v1377 = vld [vmem:[#allocation9 + $0x88] sm:$0xff]
          %v1378 = vld [vmem:[#allocation9 + $0x90] sm:$0xff]
          %v1379 = vld [vmem:[#allocation9 + $0x98] sm:$0xff]
          %v1380 = vld [vmem:[#allocation9 + $0xa0] sm:$0xff]
          %v1381 = vld [vmem:[#allocation9 + $0xa8] sm:$0xff]
          %v1382 = vld [vmem:[#allocation9 + $0xb0] sm:$0xff]
          %v1383 = vld [vmem:[#allocation9 + $0xb8] sm:$0xff]
          %v1384 = vld [vmem:[#allocation9 + $0xc0] sm:$0xff]
          %v1385 = vld [vmem:[#allocation9 + $0xc8] sm:$0xff]
          %v1386 = vld [vmem:[#allocation9 + $0xd0] sm:$0xff]
          %v1387 = vld [vmem:[#allocation9 + $0xd8] sm:$0xff]
          %v1388 = vld [vmem:[#allocation9 + $0xe0] sm:$0xff]
          %v1389 = vld [vmem:[#allocation9 + $0xe8] sm:$0xff]
          %v1390 = vld [vmem:[#allocation9 + $0xf0] sm:$0xff]
          %v1391 = vld [vmem:[#allocation9 + $0xf8] sm:$0xff]
          %v1392 = vld [vmem:[#allocation9 + $0x100] sm:$0xff]
          %v1393 = vld [vmem:[#allocation9 + $0x108] sm:$0xff]
          %v1394 = vld [vmem:[#allocation9 + $0x110] sm:$0xff]
          %v1395 = vld [vmem:[#allocation9 + $0x118] sm:$0xff]
          %v1396 = vld [vmem:[#allocation9 + $0x120] sm:$0xff]
          %v1397 = vld [vmem:[#allocation9 + $0x128] sm:$0xff]
          %v1398 = vld [vmem:[#allocation9 + $0x130] sm:$0xff]
          %v1399 = vld [vmem:[#allocation9 + $0x138] sm:$0xff]
          %v1400 = vld [vmem:[#allocation9 + $0x140] sm:$0xff]
          %v1401 = vld [vmem:[#allocation9 + $0x148] sm:$0xff]
          %v1402 = vld [vmem:[#allocation9 + $0x150] sm:$0xff]
          %v1403 = vld [vmem:[#allocation9 + $0x158] sm:$0xff]
          %v1404 = vld [vmem:[#allocation9 + $0x160] sm:$0xff]
          %v1405 = vld [vmem:[#allocation9 + $0x168] sm:$0xff]
          %v1406 = vld [vmem:[#allocation9 + $0x170] sm:$0xff]
          %v1407 = vld [vmem:[#allocation9 + $0x178] sm:$0xff]
          %v1408 = vld [vmem:[#allocation9 + $0x180] sm:$0xff]
          %v1409 = vld [vmem:[#allocation9 + $0x188] sm:$0xff]
          %v1410 = vld [vmem:[#allocation9 + $0x190] sm:$0xff]
          %v1411 = vld [vmem:[#allocation9 + $0x198] sm:$0xff]
          %v1412 = vld [vmem:[#allocation9 + $0x1a0] sm:$0xff]
          %v1413 = vld [vmem:[#allocation9 + $0x1a8] sm:$0xff]
          %v1414 = vld [vmem:[#allocation9 + $0x1b0] sm:$0xff]
          %v1415 = vld [vmem:[#allocation9 + $0x1b8] sm:$0xff]
          %v1416 = vld [vmem:[#allocation9 + $0x1c0] sm:$0xff]
          %v1417 = vld [vmem:[#allocation9 + $0x1c8] sm:$0xff]
          %v1418 = vld [vmem:[#allocation9 + $0x1d0] sm:$0xff]
          %v1419 = vld [vmem:[#allocation9 + $0x1d8] sm:$0xff]
          %v1420 = vld [vmem:[#allocation9 + $0x1e0] sm:$0xff]
          %v1421 = vld [vmem:[#allocation9 + $0x1e8] sm:$0xff]
          %v1422 = vld [vmem:[#allocation9 + $0x1f0] sm:$0xff]
          %v1423 = vld [vmem:[#allocation9 + $0x1f8] sm:$0xff]
          %v1424 = vld [vmem:[%s4] sm:$0x3]
          %v1426 = vlaneseq
          %v1427 = vshrl.u32 %v1426, 7
          %v1428 = vsub.s32 0, %v1427
          %v1429 = vrot.slane %v1424, %v1428
          %v1430 = vlaneseq
          %v1431 = vshrl.u32 %v1430, 7
          %v1432 = vsub.s32 1, %v1431
          %v1433 = vrot.slane %v1424, %v1432
          %v1500 = vunpack.c.l.b16 %v1360
          %v1501 = vunpack.c.h.b16 %v1360
          %v1502 = vunpack.c.l.b16 %v1361
          %v1503 = vunpack.c.h.b16 %v1361
          %v1504 = vunpack.c.l.b16 %v1362
          %v1505 = vunpack.c.h.b16 %v1362
          %v1506 = vunpack.c.l.b16 %v1363
          %v1507 = vunpack.c.h.b16 %v1363
          %v1508 = vunpack.c.l.b16 %v1364
          %v1509 = vunpack.c.h.b16 %v1364
          %v1510 = vunpack.c.l.b16 %v1365
          %v1511 = vunpack.c.h.b16 %v1365
          %v1512 = vunpack.c.l.b16 %v1366
          %v1513 = vunpack.c.h.b16 %v1366
          %v1514 = vunpack.c.l.b16 %v1367
          %v1515 = vunpack.c.h.b16 %v1367
          %v1516 = vunpack.c.l.b16 %v1368
          %v1517 = vunpack.c.h.b16 %v1368
          %v1518 = vunpack.c.l.b16 %v1369
          %v1519 = vunpack.c.h.b16 %v1369
          %v1520 = vunpack.c.l.b16 %v1370
          %v1521 = vunpack.c.h.b16 %v1370
          %v1522 = vunpack.c.l.b16 %v1371
          %v1523 = vunpack.c.h.b16 %v1371
          %v1524 = vunpack.c.l.b16 %v1372
          %v1525 = vunpack.c.h.b16 %v1372
          %v1526 = vunpack.c.l.b16 %v1373
          %v1527 = vunpack.c.h.b16 %v1373
          %v1528 = vunpack.c.l.b16 %v1374
          %v1529 = vunpack.c.h.b16 %v1374
          %v1530 = vunpack.c.l.b16 %v1375
          %v1531 = vunpack.c.h.b16 %v1375
          %v1532 = vunpack.c.l.b16 %v1376
          %v1533 = vunpack.c.h.b16 %v1376
          %v1534 = vunpack.c.l.b16 %v1377
          %v1535 = vunpack.c.h.b16 %v1377
          %v1536 = vunpack.c.l.b16 %v1378
          %v1537 = vunpack.c.h.b16 %v1378
          %v1538 = vunpack.c.l.b16 %v1379
          %v1539 = vunpack.c.h.b16 %v1379
          %v1540 = vunpack.c.l.b16 %v1380
          %v1541 = vunpack.c.h.b16 %v1380
          %v1542 = vunpack.c.l.b16 %v1381
          %v1543 = vunpack.c.h.b16 %v1381
          %v1544 = vunpack.c.l.b16 %v1382
          %v1545 = vunpack.c.h.b16 %v1382
          %v1546 = vunpack.c.l.b16 %v1383
          %v1547 = vunpack.c.h.b16 %v1383
          %v1548 = vunpack.c.l.b16 %v1384
          %v1549 = vunpack.c.h.b16 %v1384
          %v1550 = vunpack.c.l.b16 %v1385
          %v1551 = vunpack.c.h.b16 %v1385
          %v1552 = vunpack.c.l.b16 %v1386
          %v1553 = vunpack.c.h.b16 %v1386
          %v1554 = vunpack.c.l.b16 %v1387
          %v1555 = vunpack.c.h.b16 %v1387
          %v1556 = vunpack.c.l.b16 %v1388
          %v1557 = vunpack.c.h.b16 %v1388
          %v1558 = vunpack.c.l.b16 %v1389
          %v1559 = vunpack.c.h.b16 %v1389
          %v1560 = vunpack.c.l.b16 %v1390
          %v1561 = vunpack.c.h.b16 %v1390
          %v1562 = vunpack.c.l.b16 %v1391
          %v1563 = vunpack.c.h.b16 %v1391
          %v1564 = vunpack.c.l.b16 %v1392
          %v1565 = vunpack.c.h.b16 %v1392
          %v1566 = vunpack.c.l.b16 %v1393
          %v1567 = vunpack.c.h.b16 %v1393
          %v1568 = vunpack.c.l.b16 %v1394
          %v1569 = vunpack.c.h.b16 %v1394
          %v1570 = vunpack.c.l.b16 %v1395
          %v1571 = vunpack.c.h.b16 %v1395
          %v1572 = vunpack.c.l.b16 %v1396
          %v1573 = vunpack.c.h.b16 %v1396
          %v1574 = vunpack.c.l.b16 %v1397
          %v1575 = vunpack.c.h.b16 %v1397
          %v1576 = vunpack.c.l.b16 %v1398
          %v1577 = vunpack.c.h.b16 %v1398
          %v1578 = vunpack.c.l.b16 %v1399
          %v1579 = vunpack.c.h.b16 %v1399
          %v1580 = vunpack.c.l.b16 %v1400
          %v1581 = vunpack.c.h.b16 %v1400
          %v1582 = vunpack.c.l.b16 %v1401
          %v1583 = vunpack.c.h.b16 %v1401
          %v1584 = vunpack.c.l.b16 %v1402
          %v1585 = vunpack.c.h.b16 %v1402
          %v1586 = vunpack.c.l.b16 %v1403
          %v1587 = vunpack.c.h.b16 %v1403
          %v1588 = vunpack.c.l.b16 %v1404
          %v1589 = vunpack.c.h.b16 %v1404
          %v1590 = vunpack.c.l.b16 %v1405
          %v1591 = vunpack.c.h.b16 %v1405
          %v1592 = vunpack.c.l.b16 %v1406
          %v1593 = vunpack.c.h.b16 %v1406
          %v1594 = vunpack.c.l.b16 %v1407
          %v1595 = vunpack.c.h.b16 %v1407
          %v1596 = vunpack.c.l.b16 %v1408
          %v1597 = vunpack.c.h.b16 %v1408
          %v1598 = vunpack.c.l.b16 %v1409
          %v1599 = vunpack.c.h.b16 %v1409
          %v1600 = vunpack.c.l.b16 %v1410
          %v1601 = vunpack.c.h.b16 %v1410
          %v1602 = vunpack.c.l.b16 %v1411
          %v1603 = vunpack.c.h.b16 %v1411
          %v1604 = vunpack.c.l.b16 %v1412
          %v1605 = vunpack.c.h.b16 %v1412
          %v1606 = vunpack.c.l.b16 %v1413
          %v1607 = vunpack.c.h.b16 %v1413
          %v1608 = vunpack.c.l.b16 %v1414
          %v1609 = vunpack.c.h.b16 %v1414
          %v1610 = vunpack.c.l.b16 %v1415
          %v1611 = vunpack.c.h.b16 %v1415
          %v1612 = vunpack.c.l.b16 %v1416
          %v1613 = vunpack.c.h.b16 %v1416
          %v1614 = vunpack.c.l.b16 %v1417
          %v1615 = vunpack.c.h.b16 %v1417
          %v1616 = vunpack.c.l.b16 %v1418
          %v1617 = vunpack.c.h.b16 %v1418
          %v1618 = vunpack.c.l.b16 %v1419
          %v1619 = vunpack.c.h.b16 %v1419
          %v1620 = vunpack.c.l.b16 %v1420
          %v1621 = vunpack.c.h.b16 %v1420
          %v1622 = vunpack.c.l.b16 %v1421
          %v1623 = vunpack.c.h.b16 %v1421
          %v1624 = vunpack.c.l.b16 %v1422
          %v1625 = vunpack.c.h.b16 %v1422
          %v1626 = vunpack.c.l.b16 %v1423
          %v1627 = vunpack.c.h.b16 %v1423
          %v1628 = vpack.c.b16 %v1502, %v1500
          %v1629 = vpack.c.b16 %v1503, %v1501
          %v1630 = vpack.c.b16 %v1506, %v1504
          %v1631 = vpack.c.b16 %v1507, %v1505
          %v1632 = vpack.c.b16 %v1510, %v1508
          %v1633 = vpack.c.b16 %v1511, %v1509
          %v1634 = vpack.c.b16 %v1514, %v1512
          %v1635 = vpack.c.b16 %v1515, %v1513
          %v1636 = vpack.c.b16 %v1518, %v1516
          %v1637 = vpack.c.b16 %v1519, %v1517
          %v1638 = vpack.c.b16 %v1522, %v1520
          %v1639 = vpack.c.b16 %v1523, %v1521
          %v1640 = vpack.c.b16 %v1526, %v1524
          %v1641 = vpack.c.b16 %v1527, %v1525
          %v1642 = vpack.c.b16 %v1530, %v1528
          %v1643 = vpack.c.b16 %v1531, %v1529
          %v1644 = vpack.c.b16 %v1534, %v1532
          %v1645 = vpack.c.b16 %v1535, %v1533
          %v1646 = vpack.c.b16 %v1538, %v1536
          %v1647 = vpack.c.b16 %v1539, %v1537
          %v1648 = vpack.c.b16 %v1542, %v1540
          %v1649 = vpack.c.b16 %v1543, %v1541
          %v1650 = vpack.c.b16 %v1546, %v1544
          %v1651 = vpack.c.b16 %v1547, %v1545
          %v1652 = vpack.c.b16 %v1550, %v1548
          %v1653 = vpack.c.b16 %v1551, %v1549
          %v1654 = vpack.c.b16 %v1554, %v1552
          %v1655 = vpack.c.b16 %v1555, %v1553
          %v1656 = vpack.c.b16 %v1558, %v1556
          %v1657 = vpack.c.b16 %v1559, %v1557
          %v1658 = vpack.c.b16 %v1562, %v1560
          %v1659 = vpack.c.b16 %v1563, %v1561
          %v1660 = vpack.c.b16 %v1566, %v1564
          %v1661 = vpack.c.b16 %v1567, %v1565
          %v1662 = vpack.c.b16 %v1570, %v1568
          %v1663 = vpack.c.b16 %v1571, %v1569
          %v1664 = vpack.c.b16 %v1574, %v1572
          %v1665 = vpack.c.b16 %v1575, %v1573
          %v1666 = vpack.c.b16 %v1578, %v1576
          %v1667 = vpack.c.b16 %v1579, %v1577
          %v1668 = vpack.c.b16 %v1582, %v1580
          %v1669 = vpack.c.b16 %v1583, %v1581
          %v1670 = vpack.c.b16 %v1586, %v1584
          %v1671 = vpack.c.b16 %v1587, %v1585
          %v1672 = vpack.c.b16 %v1590, %v1588
          %v1673 = vpack.c.b16 %v1591, %v1589
          %v1674 = vpack.c.b16 %v1594, %v1592
          %v1675 = vpack.c.b16 %v1595, %v1593
          %v1676 = vpack.c.b16 %v1598, %v1596
          %v1677 = vpack.c.b16 %v1599, %v1597
          %v1678 = vpack.c.b16 %v1602, %v1600
          %v1679 = vpack.c.b16 %v1603, %v1601
          %v1680 = vpack.c.b16 %v1606, %v1604
          %v1681 = vpack.c.b16 %v1607, %v1605
          %v1682 = vpack.c.b16 %v1610, %v1608
          %v1683 = vpack.c.b16 %v1611, %v1609
          %v1684 = vpack.c.b16 %v1614, %v1612
          %v1685 = vpack.c.b16 %v1615, %v1613
          %v1686 = vpack.c.b16 %v1618, %v1616
          %v1687 = vpack.c.b16 %v1619, %v1617
          %v1688 = vpack.c.b16 %v1622, %v1620
          %v1689 = vpack.c.b16 %v1623, %v1621
          %v1690 = vpack.c.b16 %v1626, %v1624
          %v1691 = vpack.c.b16 %v1627, %v1625
          %1756 = vmatprep.subr.bf16.mxu0 %v1643
          %1757 = vmatpush1.bf16.msra.mxu0 %v1642
          %1758 = vmatprep.subr.bf16.mxu0 %v1641
          %1759 = vmatpush1.bf16.msra.mxu0 %v1640
          %1760 = vmatprep.subr.bf16.mxu0 %v1639
          %1761 = vmatpush1.bf16.msra.mxu0 %v1638
          %1762 = vmatprep.subr.bf16.mxu0 %v1637
          %1763 = vmatpush1.bf16.msra.mxu0 %v1636
          %1764 = vmatprep.subr.bf16.mxu0 %v1635
          %1765 = vmatpush1.bf16.msra.mxu0 %v1634
          %1766 = vmatprep.subr.bf16.mxu0 %v1633
          %1767 = vmatpush1.bf16.msra.mxu0 %v1632
          %1768 = vmatprep.subr.bf16.mxu0 %v1631
          %1769 = vmatpush1.bf16.msra.mxu0 %v1630
          %1770 = vmatprep.subr.bf16.mxu0 %v1629
          %1771 = vmatpush1.bf16.msra.mxu0 %v1628
          %1772 = vmatprep.subr.bf16.mxu0 %v1659
          %1773 = vmatpush2.bf16.msra.mxu0 %v1658
          %1774 = vmatprep.subr.bf16.mxu0 %v1657
          %1775 = vmatpush2.bf16.msra.mxu0 %v1656
          %1776 = vmatprep.subr.bf16.mxu0 %v1655
          %1777 = vmatpush2.bf16.msra.mxu0 %v1654
          %1778 = vmatprep.subr.bf16.mxu0 %v1653
          %1779 = vmatpush2.bf16.msra.mxu0 %v1652
          %1780 = vmatprep.subr.bf16.mxu0 %v1651
          %1781 = vmatpush2.bf16.msra.mxu0 %v1650
          %1782 = vmatprep.subr.bf16.mxu0 %v1649
          %1783 = vmatpush2.bf16.msra.mxu0 %v1648
          %1784 = vmatprep.subr.bf16.mxu0 %v1647
          %1785 = vmatpush2.bf16.msra.mxu0 %v1646
          %1786 = vmatprep.subr.bf16.mxu0 %v1645
          %1787 = vmatpush2.bf16.msra.mxu0 %v1644
          %1788 = vmatprep.mubr.bf16.mxu0 %v1357
          %1789 = vmatmul.mubr.bf16.gmra.mxu0 %v1356
          %v1790 = vpop.f32.mrf.mxu0
          %v1791 = vadd.f32 %v1429, %v1790
          %v1792 = vpop.f32.mrf.mxu0
          %v1793 = vadd.f32 %v1433, %v1792
          %v1794 = vpop.f32.mrf.mxu0
          %v1795 = vpop.f32.mrf.mxu0
          %1796 = vdwg.mxu0
          %1797 = vmatprep.subr.bf16.mxu0 %v1675
          %1798 = vmatpush1.bf16.msra.mxu0 %v1674
          %1799 = vmatprep.subr.bf16.mxu0 %v1673
          %1800 = vmatpush1.bf16.msra.mxu0 %v1672
          %1801 = vmatprep.subr.bf16.mxu0 %v1671
          %1802 = vmatpush1.bf16.msra.mxu0 %v1670
          %1803 = vmatprep.subr.bf16.mxu0 %v1669
          %1804 = vmatpush1.bf16.msra.mxu0 %v1668
          %1805 = vmatprep.subr.bf16.mxu0 %v1667
          %1806 = vmatpush1.bf16.msra.mxu0 %v1666
          %1807 = vmatprep.subr.bf16.mxu0 %v1665
          %1808 = vmatpush1.bf16.msra.mxu0 %v1664
          %1809 = vmatprep.subr.bf16.mxu0 %v1663
          %1810 = vmatpush1.bf16.msra.mxu0 %v1662
          %1811 = vmatprep.subr.bf16.mxu0 %v1661
          %1812 = vmatpush1.bf16.msra.mxu0 %v1660
          %1813 = vmatprep.subr.bf16.mxu0 %v1691
          %1814 = vmatpush2.bf16.msra.mxu0 %v1690
          %1815 = vmatprep.subr.bf16.mxu0 %v1689
          %1816 = vmatpush2.bf16.msra.mxu0 %v1688
          %1817 = vmatprep.subr.bf16.mxu0 %v1687
          %1818 = vmatpush2.bf16.msra.mxu0 %v1686
          %1819 = vmatprep.subr.bf16.mxu0 %v1685
          %1820 = vmatpush2.bf16.msra.mxu0 %v1684
          %1821 = vmatprep.subr.bf16.mxu0 %v1683
          %1822 = vmatpush2.bf16.msra.mxu0 %v1682
          %1823 = vmatprep.subr.bf16.mxu0 %v1681
          %1824 = vmatpush2.bf16.msra.mxu0 %v1680
          %1825 = vmatprep.subr.bf16.mxu0 %v1679
          %1826 = vmatpush2.bf16.msra.mxu0 %v1678
          %1827 = vmatprep.subr.bf16.mxu0 %v1677
          %1828 = vmatpush2.bf16.msra.mxu0 %v1676
          %1829 = vmatprep.mubr.bf16.mxu0 %v1359
          %1830 = vmatmul.mubr.bf16.gmra.mxu0 %v1358
          %v1831 = vpop.f32.mrf.mxu0
          %v1832 = vadd.f32 %v1791, %v1831
          %v1833 = vpop.f32.mrf.mxu0
          %v1834 = vadd.f32 %v1793, %v1833
          %v1835 = vpop.f32.mrf.mxu0
          %v1836 = vpop.f32.mrf.mxu0
          %1837 = vdwg.mxu0
          %vm1838 = vcmp.gt.f32.partialorder %v1832, 0.0
          %vm1839 = vcmp.gt.f32.partialorder %v1834, 0.0
          %v1840 = vmul.f32 %v1832, 0.2
          %v1841 = vmul.f32 %v1834, 0.2
          %v1842 = vsel %vm1838, %v1832, %v1840
          %v1843 = vsel %vm1839, %v1834, %v1841
          %v1844 = vld [vmem:[%s5] sm:$0x3]
          %v1846 = vlaneseq
          %v1847 = vshrl.u32 %v1846, 7
          %v1848 = vsub.s32 0, %v1847
          %v1849 = vrot.slane %v1844, %v1848
          %v1850 = vlaneseq
          %v1851 = vshrl.u32 %v1850, 7
          %v1852 = vsub.s32 1, %v1851
          %v1853 = vrot.slane %v1844, %v1852
          %v1856 = vmul.f32 %v1842, %v1849
          %v1857 = vmul.f32 %v1843, %v1853
          %v1858 = vadd.f32 %v1856, %v1857
          %1859 = vadd.xlane.f32.xlu0 %v1858
          %v1860 = vpop.xlane.xlu0 %1859
          %v1861 = vld [vmem:[#allocation3] sm:$0x1]
          %v1863 = vlaneseq
          %v1864 = vshrl.u32 %v1863, 7
          %v1865 = vsub.s32 0, %v1864
          %v1866 = vrot.slane %v1861, %v1865
          %v1868 = vadd.f32 %v1860, %v1866
          %1870 = vset.pattern.permute.xlu0 0
          %1871 = vperm.xlu0 %1870, %v1868
          %v1872 = vpop.permute.xlu0 %1871
          %1874 = vst [vmem:[#allocation10] sm:$0xff] %v1872
        $region68: #{tpu_custom_call.1} parent=47 // pred_fallthru
          _
        // Predicated region
        $region69: #{tpu_custom_call.1} parent=47 // pred_check
          %p1875 = pneg %p197
        $region70: #{tpu_custom_call.1} parent=47 // pred_check_branch
          %1877 = sbr.rel (%p1875) target = $region72
        $region71: #{tpu_custom_call.1} parent=47 // pred_region
          %s1879 = ssub.s32 128, 128
          %1880 = vsyncadd [#allocation6], %s1879
          %s1882 = sshll.u32 [#allocation10], 4
          %s1883 = int_to_ptr.vmem [resolvable:$true] %s1882
          %1885 = dma.vmem_to_hbm [thread:$0]  %s1883, 128, %s7, [#allocation6]
        $region72: #{tpu_custom_call.1} parent=47 // pred_fallthru
          _
        // Predicated region
        $region73: #{tpu_custom_call.1} parent=47 // pred_check
          %p1886 = pneg %p197
        $region74: #{tpu_custom_call.1} parent=47 // pred_check_branch
          %1888 = sbr.rel (%p1886) target = $region76
        $region75: #{tpu_custom_call.1} parent=47 // pred_region
          %1889 = dma.done [#allocation6], 128
        $region76: #{tpu_custom_call.1} parent=47 // pred_fallthru
          _
      $region48: #{tpu_custom_call.1} parent=5 // pred_fallthru
        _
      %p1890 = scmp.le.s32.totalorder 2, %s22
      // Predicated region
      $region77: #{tpu_custom_call.1} parent=5 // pred_check
        %p1891 = pneg %p1890
      $region78: #{tpu_custom_call.1} parent=5 // pred_check_branch
        %1893 = sbr.rel (%p1891) target = $region80
      $region79: #{tpu_custom_call.1} parent=5 // pred_region
        %s1894 = ssub.s32 %s22, 2
      $region80: #{tpu_custom_call.1} parent=5 // pred_fallthru
        _
    $region6: #{tpu_custom_call.1} parent=1 // loop_footer
      %s26 = sadd.s32 1, %s22
    $region7: #{tpu_custom_call.1} parent=1 // loop_footer_branch
      %21 = sbr.rel target = $region3
    $region8: #{tpu_custom_call.1} parent=1 // loop_exit
      _
    %1895 = vsyncpa [#allocation5], 1
    %s1896 = scalar_lea.sflag [#allocation5], 1
    %1897 = vsyncpa %s1896, 1
    %1898 = vsyncpa [#allocation8], 1
    %s1899 = scalar_lea.sflag [#allocation8], 1
    %1900 = vsyncpa %s1899, 1
    %1901 = vsyncpa [#allocation6], 1
    %s1902 = scalar_lea.sflag [#allocation6], 1
    %1903 = vsyncpa %s1902, 1

</llo_original>
